<compile_context>
chip_gen: v5e
topology: v5e:2x2
jax: 0.10.0
libtpu: 0.0.40
codegen_flags: <defaults>
</compile_context>

<pallas_src>
import functools

import jax
import jax.numpy as jnp
import numpy as np
from jax import lax
from jax.experimental import pallas as pl
from jax.experimental.pallas import tpu as pltpu


# ---------------------------------------------------------------------------
# Pallas kernel: one HeteroGraphConv(GATConv, sum) layer for one dst node type
# ---------------------------------------------------------------------------
def _hgat_layer_kernel(nt_ref, dst_ref, src_ref, w_ref, alw_ref, arw_ref, b_ref,
                       adj_ref, out_ref, er_s, m_s, l_s, acc_s,
                       *, num_heads, head_dim, apply_elu):
    """Grid = (dst_tile i, relation r, src_tile s).

    nt_ref  : (R,)          int32 SMEM  real src-tile count per relation (prefetched)
    dst_ref : (TM, F)       bf16  dst-type node features (tile)
    src_ref : (1, TS, F)    bf16  src features of relation r (tile)
    w_ref   : (1, F, H*D)   bf16  GATConv fc weight of relation r
    alw_ref : (1, H, F)     bf16  attn_l folded into W  (Al . W^T)
    arw_ref : (1, H, 1, F)  f32   attn_r folded into W  (Ar . W^T), broadcast-ready
    b_ref   : (1, 1, H*D)   f32   bias of relation r
    adj_ref : (1, TM, TS)   int8  dense {0,1} adjacency  adj[dst, src]
    out_ref : (TM, H*D)     f32   relation sum (optionally ELU'd), heads flattened
    er_s, m_s, l_s : (H, TM, 1) f32  online-softmax state (head-leading layout)
    acc_s   : (H, TM, D)    f32   attention-weighted feature accumulator
    """
    H, D = num_heads, head_dim
    r = pl.program_id(1)
    s = pl.program_id(2)
    n_rel = pl.num_programs(1)
    n_s_grid = pl.num_programs(2)
    n_t = nt_ref[r]                          # real (non fully-padded) src tiles of rel r
    neg = jnp.float32(-1e30)

    # Init the cross-relation accumulator once per dst tile.
    @pl.when((r == 0) & (s == 0))
    def _init_out():
        out_ref[...] = jnp.zeros(out_ref.shape, out_ref.dtype)

    # Init the per-relation online-softmax state once per (dst tile, relation).
    @pl.when(s == 0)
    def _init_rel():
        # er[h, m] = <(dst @ W)[m, head h], attn_r[h]> = sum_f dst[m, f] * arw[h, f]
        # Tiny VPU keepdims contraction -> lands directly in the (H, TM, 1) layout.
        er_s[...] = jnp.sum(arw_ref[0] * dst_ref[...], axis=-1, keepdims=True)
        m_s[...] = jnp.full(m_s.shape, neg, jnp.float32)
        l_s[...] = jnp.zeros(l_s.shape, jnp.float32)
        acc_s[...] = jnp.zeros(acc_s.shape, jnp.float32)

    # Online-softmax step over one src tile (skipped for fully padded tiles).
    @pl.when(s < n_t)
    def _step():
        src = src_ref[0]                                                   # (TS, F)
        feat_src = jnp.dot(src, w_ref[0],
                           preferred_element_type=jnp.float32)             # (TS, H*D)
        feat_src_b = feat_src.astype(jnp.bfloat16)
        el = lax.dot_general(alw_ref[0], src, (((1,), (1,)), ((), ())),
                             preferred_element_type=jnp.float32)           # (H, TS)
        mask = adj_ref[0].astype(jnp.int32) > 0                            # (TM, TS)

        # All heads batched: (H, TM, TS) logits, leaky_relu, single mask select.
        e = er_s[...] + el[:, None, :]
        e = jnp.maximum(e, 0.2 * e)                       # leaky_relu(0.2)
        e = jnp.where(mask[None], e, neg)                 # mask non-edges

        m_prev = m_s[...]                                                   # (H, TM, 1)
        m_new = jnp.maximum(m_prev, jnp.max(e, axis=-1, keepdims=True))
        # NOTE: no second mask on exp(): rows whose running max is still -1e30
        # accumulate garbage that is cancelled by scale == exp(-1e30 - finite) == 0
        # as soon as a real edge appears; rows with no edge at all are padded rows
        # that are sliced off on the host (DGL rejects zero-in-degree anyway).
        p = jnp.exp(e - m_new)                                              # (H, TM, TS)
        scale = jnp.exp(m_prev - m_new)                                     # (H, TM, 1)
        l_s[...] = scale * l_s[...] + jnp.sum(p, axis=-1, keepdims=True)
        p_b = p.astype(jnp.bfloat16)
        for h in range(H):                  # short static loop; full-view acc stores
            acc_s[h] = scale[h] * acc_s[h] + jnp.dot(
                p_b[h], feat_src_b[:, h * D:(h + 1) * D],
                preferred_element_type=jnp.float32)
        m_s[...] = m_new

    # Finish this relation: normalize, add bias, accumulate into the dst-type output.
    @pl.when(s == n_t - 1)
    def _finish_rel():
        inv_l = pl.reciprocal(jnp.maximum(l_s[...], jnp.float32(1e-20)),
                              approx=True)                                  # (H, TM, 1)
        rel_out = jnp.concatenate([acc_s[h] * inv_l[h] for h in range(H)],
                                  axis=-1)                                  # (TM, H*D)
        out_ref[...] += rel_out + b_ref[0]                 # one lane-dense store

    if apply_elu:  # fused ELU of the relation sum (layer 1 only)
        @pl.when((r == n_rel - 1) & (s == n_s_grid - 1))
        def _elu():
            v = out_ref[...]
            out_ref[...] = jnp.where(v > 0, v, jnp.exp(jnp.minimum(v, 0.0)) - 1.0)


# ---------------------------------------------------------------------------
# Host-side wrappers
# ---------------------------------------------------------------------------
def _cdiv(a, b):
    return (a + b - 1) // b


def _round_up(x, m):
    return _cdiv(x, m) * m


def _pad_rows(x, n):
    return x if x.shape[0] == n else jnp.pad(x, ((0, n - x.shape[0]), (0, 0)))


def _fold_attn_weights(p, num_heads, head_dim):
    W = p["W"]                                          # (F, H*D)
    W3 = W.reshape(W.shape[0], num_heads, head_dim)     # (F, H, D)
    alw = jnp.einsum("hd,fhd->hf", p["attn_l"], W3)     # (H, F)
    arw = jnp.einsum("hd,fhd->hf", p["attn_r"], W3)     # (H, F)
    return alw, arw


def gat_hetero_layer(graph, feats, params, *, num_heads, head_dim, apply_elu,
                     tm=256, max_ts=1024, vmem_limit_bytes=None):
    """One HeteroGraphConv({rel: GATConv}, aggregate='sum') layer.

    graph: list of (src_type, rel_name, dst_type, adj[dst, src]) with dense {0,1}
    adjacency.  Returns dict dst_type -> (N_dst, num_heads * head_dim) float32.

    Defaults (tm=256, max_ts=1024) keep per-step VMEM well under the scoped
    default even with the (H, TM, TS) f32 softmax temporaries; raise
    vmem_limit_bytes before pushing tiles much larger (v7x has 64 MiB/TC).
    """
    HD = num_heads * head_dim
    tm = _round_up(max(tm, 32), 32)            # int8 adjacency sublane tile = 32
    max_ts = _round_up(max(max_ts, 128), 128)  # int8 adjacency lane tile = 128

    by_dst = {}
    for (src_t, rel, dst_t, adj) in graph:
        by_dst.setdefault(dst_t, []).append((src_t, rel, adj))

    out = {}
    for dst_t, rels in by_dst.items():
        n_dst, f_in = feats[dst_t].shape
        n_rel = len(rels)
        # Keep >=2 dst tiles when possible so the "parallel" axis can span both
        # TensorCores on megacore / v7x parts.
        tm_t = max(32, min(tm, _round_up(_cdiv(n_dst, 2), 32)))
        n_dst_pad = _round_up(n_dst, tm_t)

        n_src_max = max(feats[s].shape[0] for (s, _, _) in rels)
        ts = min(max_ts, _round_up(n_src_max, 128))
        n_src_pad = _round_up(n_src_max, ts)

        # Real src-tile count per relation; fully padded tiles are skipped in-kernel.
        n_tiles = jnp.array([_cdiv(feats[s].shape[0], ts) for (s, _, _) in rels],
                            dtype=jnp.int32)

        dst_f = _pad_rows(feats[dst_t], n_dst_pad).astype(jnp.bfloat16)
        src_stack = jnp.stack(
            [_pad_rows(feats[s], n_src_pad) for (s, _, _) in rels]).astype(jnp.bfloat16)
        adj_stack = jnp.stack(
            [jnp.pad(a, ((0, n_dst_pad - a.shape[0]), (0, n_src_pad - a.shape[1])))
             for (_, _, a) in rels]).astype(jnp.int8)      # {0,1}: half the bf16 DMA
        w_stack = jnp.stack([params[r]["W"] for (_, r, _) in rels]).astype(jnp.bfloat16)
        folded = [_fold_attn_weights(params[r], num_heads, head_dim)
                  for (_, r, _) in rels]
        alw_stack = jnp.stack([f[0] for f in folded]).astype(jnp.bfloat16)      # (R,H,F)
        arw_stack = jnp.stack([f[1] for f in folded]
                              ).astype(jnp.float32)[:, :, None, :]              # (R,H,1,F)
        b_stack = jnp.stack([params[r]["bias"].reshape(1, HD) for (_, r, _) in rels]
                            ).astype(jnp.float32)                               # (R,1,HD)

        grid = (n_dst_pad // tm_t, n_rel, n_src_pad // ts)
        kernel = functools.partial(_hgat_layer_kernel, num_heads=num_heads,
                                   head_dim=head_dim, apply_elu=apply_elu)
        res = pl.pallas_call(
            kernel,
            out_shape=jax.ShapeDtypeStruct((n_dst_pad, HD), jnp.float32),
            grid_spec=pltpu.PrefetchScalarGridSpec(
                num_scalar_prefetch=1,
                grid=grid,
                in_specs=[
                    pl.BlockSpec((tm_t, f_in), lambda i, r, s, nt: (i, 0)),      # dst
                    pl.BlockSpec((1, ts, f_in),                                  # src
                                 lambda i, r, s, nt: (r, jnp.minimum(s, nt[r] - 1), 0)),
                    pl.BlockSpec((1, f_in, HD), lambda i, r, s, nt: (r, 0, 0)),  # W
                    pl.BlockSpec((1, num_heads, f_in),
                                 lambda i, r, s, nt: (r, 0, 0)),                 # Al.W^T
                    pl.BlockSpec((1, num_heads, 1, f_in),
                                 lambda i, r, s, nt: (r, 0, 0, 0)),              # Ar.W^T
                    pl.BlockSpec((1, 1, HD), lambda i, r, s, nt: (r, 0, 0)),     # bias
                    pl.BlockSpec((1, tm_t, ts),                                  # adj i8
                                 lambda i, r, s, nt: (r, i, jnp.minimum(s, nt[r] - 1))),
                ],
                out_specs=pl.BlockSpec((tm_t, HD), lambda i, r, s, nt: (i, 0)),
                scratch_shapes=[
                    pltpu.VMEM((num_heads, tm_t, 1), jnp.float32),        # er
                    pltpu.VMEM((num_heads, tm_t, 1), jnp.float32),        # running max m
                    pltpu.VMEM((num_heads, tm_t, 1), jnp.float32),        # running denom l
                    pltpu.VMEM((num_heads, tm_t, head_dim), jnp.float32)  # weighted acc
                ]),
            compiler_params=pltpu.CompilerParams(
                dimension_semantics=("parallel", "arbitrary", "arbitrary"),
                vmem_limit_bytes=vmem_limit_bytes),
        )(n_tiles, dst_f, src_stack, w_stack, alw_stack, arw_stack, b_stack, adj_stack)
        out[dst_t] = res[:n_dst]
    return out


def hgat_forward(graph, inputs, params1, params2, *, num_heads, hid_feats, out_feats,
                 tm=256, max_ts=1024, vmem_limit_bytes=None):
    h = gat_hetero_layer(graph, inputs, params1, num_heads=num_heads,
                         head_dim=hid_feats // num_heads, apply_elu=True,
                         tm=tm, max_ts=max_ts, vmem_limit_bytes=vmem_limit_bytes)
    h = gat_hetero_layer(graph, h, params2, num_heads=1, head_dim=out_feats,
                         apply_elu=False, tm=tm, max_ts=max_ts,
                         vmem_limit_bytes=vmem_limit_bytes)
    return h  # gat2 has a single head -> mean over the head dim is the identity


# ---------------------------------------------------------------------------
# Pure-JAX reference (f32, dense masked edge softmax) for correctness checking
# ---------------------------------------------------------------------------
def _ref_gat_rel(src, dst, adj, p, num_heads, head_dim):
    W, al, ar, b = p["W"], p["attn_l"], p["attn_r"], p["bias"]
    fs = (src @ W).reshape(src.shape[0], num_heads, head_dim)
    fd = (dst @ W).reshape(dst.shape[0], num_heads, head_dim)
    el = (fs * al[None]).sum(-1)                        # (Ns, H)
    er = (fd * ar[None]).sum(-1)                        # (Nd, H)
    e = er[:, None, :] + el[None, :, :]                 # (Nd, Ns, H)
    e = jnp.where(e > 0, e, 0.2 * e)                    # leaky_relu
    mask = (adj > 0)[:, :, None]
    e = jnp.where(mask, e, -jnp.inf)
    e = e - jnp.max(e, axis=1, keepdims=True)
    w_att = jnp.where(mask, jnp.exp(e), 0.0)
    denom = jnp.maximum(w_att.sum(axis=1, keepdims=True), 1e-20)
    alpha = w_att / denom                               # (Nd, Ns, H)
    rst = jnp.einsum("nsh,shd->nhd", alpha, fs)
    return rst.reshape(dst.shape[0], num_heads * head_dim) + b.reshape(1, -1)


def _ref_hetero_layer(graph, feats, params, num_heads, head_dim):
    outs = {}
    for (src_t, rel, dst_t, adj) in graph:
        o = _ref_gat_rel(feats[src_t], feats[dst_t], adj, params[rel],
                         num_heads, head_dim)
        outs[dst_t] = o if dst_t not in outs else outs[dst_t] + o
    return outs


def hgat_forward_ref(graph, inputs, params1, params2, *, num_heads, hid_feats, out_feats):
    h = _ref_hetero_layer(graph, inputs, params1, num_heads, hid_feats // num_heads)
    h = {k: jax.nn.elu(v) for k, v in h.items()}
    h = _ref_hetero_layer(graph, h, params2, 1, out_feats)
    return h


def init_gat_params(key, in_feats, num_heads, head_dim):
    k1, k2, k3, k4 = jax.random.split(key, 4)
    return dict(
        W=jax.random.normal(k1, (in_feats, num_heads * head_dim), jnp.float32) * 0.1,
        attn_l=jax.random.normal(k2, (num_heads, head_dim), jnp.float32) * 0.1,
        attn_r=jax.random.normal(k3, (num_heads, head_dim), jnp.float32) * 0.1,
        bias=jax.random.normal(k4, (num_heads * head_dim,), jnp.float32) * 0.1,
    )


if __name__ == "__main__":
    key = jax.random.PRNGKey(0)
    in_feats, hid_feats, out_feats, num_heads = 8, 32, 16, 4
    sizes = {"A": 144, "B": 24}   # small graph; big enough to exercise dst & src tiling
    rel_defs = [("A", "r0", "B"), ("B", "r1", "A"), ("A", "r2", "A")]

    keys = jax.random.split(key, 8)

    def make_adj(k, n_dst, n_src):
        a = jax.random.bernoulli(k, 0.3, (n_dst, n_src)).astype(jnp.float32)
        # guarantee every destination node has at least one incoming edge
        # (DGL GATConv rejects zero-in-degree nodes)
        ensure = jax.nn.one_hot(jnp.arange(n_dst) % n_src, n_src, dtype=jnp.float32)
        return jnp.maximum(a, ensure)

    graph = [(s, r, d, make_adj(keys[i], sizes[d], sizes[s]))
             for i, (s, r, d) in enumerate(rel_defs)]

    inputs = {
        "A": jax.random.normal(keys[3], (sizes["A"], in_feats), jnp.float32),
        "B": jax.random.normal(keys[4], (sizes["B"], in_feats), jnp.float32),
    }

    params1 = {r: init_gat_params(jax.random.fold_in(keys[5], i),
                                  in_feats, num_heads, hid_feats // num_heads)
               for i, (_, r, _) in enumerate(rel_defs)}
    params2 = {r: init_gat_params(jax.random.fold_in(keys[6], i),
                                  hid_feats, 1, out_feats)
               for i, (_, r, _) in enumerate(rel_defs)}

    # Small tiles here only to exercise dst tiling, src streaming and the
    # padded-src-tile skip path on the tiny test graph; real workloads should
    # use the tm=256 / max_ts=1024 defaults.
    out = hgat_forward(graph, inputs, params1, params2,
                       num_heads=num_heads, hid_feats=hid_feats, out_feats=out_feats,
                       tm=64, max_ts=128)
    out = {k: jax.block_until_ready(v) for k, v in out.items()}

    ref = hgat_forward_ref(graph, inputs, params1, params2,
                           num_heads=num_heads, hid_feats=hid_feats,
                           out_feats=out_feats)

    assert out["A"].shape == (sizes["A"], out_feats), out["A"].shape
    assert out["B"].shape == (sizes["B"], out_feats), out["B"].shape
    for k in out:
        assert bool(jnp.all(jnp.isfinite(out[k])))
        np.testing.assert_allclose(np.asarray(out[k]), np.asarray(ref[k]),
                                   rtol=5e-2, atol=5e-2)
    print("KERNEL_OK")
</pallas_src>

<mosaic_0001>
module attributes {stable_mosaic.version = 11 : i64} {
  func.func @_hgat_layer_kernel(%arg0: i32, %arg1: i32, %arg2: i32, %arg3: memref<1xi32, #tpu.memory_space<smem>>, %arg4: memref<32x8xbf16, #tpu.memory_space<vmem>>, %arg5: memref<1x128x8xbf16, #tpu.memory_space<vmem>>, %arg6: memref<1x8x32xbf16, #tpu.memory_space<vmem>>, %arg7: memref<1x4x8xbf16, #tpu.memory_space<vmem>>, %arg8: memref<1x4x1x8xf32, #tpu.memory_space<vmem>>, %arg9: memref<1x1x32xf32, #tpu.memory_space<vmem>>, %arg10: memref<1x32x128xi8, #tpu.memory_space<vmem>>, %arg11: memref<32x32xf32, #tpu.memory_space<vmem>>, %arg12: memref<4x32x1xf32, #tpu.memory_space<vmem>>, %arg13: memref<4x32x1xf32, #tpu.memory_space<vmem>>, %arg14: memref<4x32x1xf32, #tpu.memory_space<vmem>>, %arg15: memref<4x32x8xf32, #tpu.memory_space<vmem>>) attributes {dimension_semantics = [#tpu.dimension_semantics<parallel>, #tpu.dimension_semantics<arbitrary>, #tpu.dimension_semantics<arbitrary>], iteration_bounds = array<i64: 1, 1, 2>, scalar_prefetch = 1 : i64, scratch_operands = 4 : i64, tpu.core_type = #tpu.core_type<tc>, window_params = [{transform_indices = @transform_0, window_bounds = array<i64: 32, 8>}, {transform_indices = @transform_1, window_bounds = array<i64: 1, 128, 8>}, {transform_indices = @transform_2, window_bounds = array<i64: 1, 8, 32>}, {transform_indices = @transform_3, window_bounds = array<i64: 1, 4, 8>}, {transform_indices = @transform_4, window_bounds = array<i64: 1, 4, 1, 8>}, {transform_indices = @transform_5, window_bounds = array<i64: 1, 1, 32>}, {transform_indices = @transform_6, window_bounds = array<i64: 1, 32, 128>}, {transform_indices = @transform_7, window_bounds = array<i64: 32, 32>}]} {
    %0 = arith.index_cast %arg1 : i32 to index
    %1 = memref.load %arg3[%0] : memref<1xi32, #tpu.memory_space<smem>>
    %c0_i32 = arith.constant 0 : i32
    %2 = arith.cmpi eq, %arg1, %c0_i32 : i32
    %c0_i32_0 = arith.constant 0 : i32
    %3 = arith.cmpi eq, %arg2, %c0_i32_0 : i32
    %4 = arith.andi %2, %3 : i1
    %5 = arith.extui %4 : i1 to i32
    %c0_i32_1 = arith.constant 0 : i32
    %6 = arith.cmpi ne, %5, %c0_i32_1 : i32
    scf.if %6 {
      %cst_10 = arith.constant 0.000000e+00 : f32
      %22 = vector.broadcast %cst_10 : f32 to vector<32x32xf32>
      %c0 = arith.constant 0 : index
      %c0_11 = arith.constant 0 : index
      %23 = vector.load %arg11[%c0, %c0_11] : memref<32x32xf32, #tpu.memory_space<vmem>>, vector<32x32xf32>
      tpu.vector_store %arg11[%c0, %c0_11], %22 {strides = array<i32>} : memref<32x32xf32, #tpu.memory_space<vmem>>, vector<32x32xf32>,
    } else {
    }
    %c0_i32_2 = arith.constant 0 : i32
    %7 = arith.cmpi eq, %arg2, %c0_i32_2 : i32
    %8 = arith.extui %7 : i1 to i32
    %cst = arith.constant -1.000000e+30 : f32
    %c0_i32_3 = arith.constant 0 : i32
    %9 = arith.cmpi ne, %8, %c0_i32_3 : i32
    scf.if %9 {
      %c0 = arith.constant 0 : index
      %c0_10 = arith.constant 0 : index
      %c0_11 = arith.constant 0 : index
      %c0_12 = arith.constant 0 : index
      %22 = vector.load %arg8[%c0, %c0_10, %c0_11, %c0_12] : memref<1x4x1x8xf32, #tpu.memory_space<vmem>>, vector<1x4x1x8xf32>
      %23 = vector.shape_cast %22 : vector<1x4x1x8xf32> to vector<4x1x8xf32>
      %c0_13 = arith.constant 0 : index
      %c0_14 = arith.constant 0 : index
      %24 = vector.load %arg4[%c0_13, %c0_14] : memref<32x8xbf16, #tpu.memory_space<vmem>>, vector<32x8xbf16>
      %25 = arith.extf %24 : vector<32x8xbf16> to vector<32x8xf32>
      %26 = vector.shape_cast %25 : vector<32x8xf32> to vector<1x32x8xf32>
      %27 = vector.broadcast %23 : vector<4x1x8xf32> to vector<4x32x8xf32>
      %28 = vector.broadcast %26 : vector<1x32x8xf32> to vector<4x32x8xf32>
      %29 = arith.mulf %27, %28 : vector<4x32x8xf32>
      %cst_15 = arith.constant dense<0.000000e+00> : vector<4x32xf32>
      %30 = vector.multi_reduction <add>, %29, %cst_15 [2] : vector<4x32x8xf32> to vector<4x32xf32>
      %31 = vector.shape_cast %30 : vector<4x32xf32> to vector<4x32x1xf32>
      %c0_16 = arith.constant 0 : index
      %c0_17 = arith.constant 0 : index
      %c0_18 = arith.constant 0 : index
      %32 = vector.load %arg12[%c0_16, %c0_17, %c0_18] : memref<4x32x1xf32, #tpu.memory_space<vmem>>, vector<4x32x1xf32>
      tpu.vector_store %arg12[%c0_16, %c0_17, %c0_18], %31 {strides = array<i32>} : memref<4x32x1xf32, #tpu.memory_space<vmem>>, vector<4x32x1xf32>,
      %33 = vector.broadcast %cst : f32 to vector<4x32x1xf32>
      %c0_19 = arith.constant 0 : index
      %c0_20 = arith.constant 0 : index
      %c0_21 = arith.constant 0 : index
      %34 = vector.load %arg13[%c0_19, %c0_20, %c0_21] : memref<4x32x1xf32, #tpu.memory_space<vmem>>, vector<4x32x1xf32>
      tpu.vector_store %arg13[%c0_19, %c0_20, %c0_21], %33 {strides = array<i32>} : memref<4x32x1xf32, #tpu.memory_space<vmem>>, vector<4x32x1xf32>,
      %cst_22 = arith.constant 0.000000e+00 : f32
      %35 = vector.broadcast %cst_22 : f32 to vector<4x32x1xf32>
      %c0_23 = arith.constant 0 : index
      %c0_24 = arith.constant 0 : index
      %c0_25 = arith.constant 0 : index
      %36 = vector.load %arg14[%c0_23, %c0_24, %c0_25] : memref<4x32x1xf32, #tpu.memory_space<vmem>>, vector<4x32x1xf32>
      tpu.vector_store %arg14[%c0_23, %c0_24, %c0_25], %35 {strides = array<i32>} : memref<4x32x1xf32, #tpu.memory_space<vmem>>, vector<4x32x1xf32>,
      %cst_26 = arith.constant 0.000000e+00 : f32
      %37 = vector.broadcast %cst_26 : f32 to vector<4x32x8xf32>
      %c0_27 = arith.constant 0 : index
      %c0_28 = arith.constant 0 : index
      %c0_29 = arith.constant 0 : index
      %38 = vector.load %arg15[%c0_27, %c0_28, %c0_29] : memref<4x32x8xf32, #tpu.memory_space<vmem>>, vector<4x32x8xf32>
      tpu.vector_store %arg15[%c0_27, %c0_28, %c0_29], %37 {strides = array<i32>} : memref<4x32x8xf32, #tpu.memory_space<vmem>>, vector<4x32x8xf32>,
    } else {
    }
    %10 = arith.cmpi slt, %arg2, %1 : i32
    %11 = arith.extui %10 : i1 to i32
    %cst_4 = arith.constant -1.000000e+30 : f32
    %c0_i32_5 = arith.constant 0 : i32
    %12 = arith.cmpi ne, %11, %c0_i32_5 : i32
    scf.if %12 {
      %c0 = arith.constant 0 : index
      %c0_10 = arith.constant 0 : index
      %c0_11 = arith.constant 0 : index
      %22 = vector.load %arg5[%c0, %c0_10, %c0_11] : memref<1x128x8xbf16, #tpu.memory_space<vmem>>, vector<1x128x8xbf16>
      %23 = vector.shape_cast %22 : vector<1x128x8xbf16> to vector<128x8xbf16>
      %c0_12 = arith.constant 0 : index
      %c0_13 = arith.constant 0 : index
      %c0_14 = arith.constant 0 : index
      %24 = vector.load %arg6[%c0_12, %c0_13, %c0_14] : memref<1x8x32xbf16, #tpu.memory_space<vmem>>, vector<1x8x32xbf16>
      %25 = vector.shape_cast %24 : vector<1x8x32xbf16> to vector<8x32xbf16>
      %cst_15 = arith.constant dense<0.000000e+00> : vector<128x32xf32>
      %26 = tpu.matmul %23, %25, %cst_15 {dimension_numbers = #tpu.dot_dimension_numbers<[1], [0], [0], [1], [0, 0, 1, 1], [], []>} : vector<128x8xbf16>, vector<8x32xbf16>, vector<128x32xf32> -> vector<128x32xf32>
      %27 = arith.truncf %26 : vector<128x32xf32> to vector<128x32xbf16>
      %c0_16 = arith.constant 0 : index
      %c0_17 = arith.constant 0 : index
      %c0_18 = arith.constant 0 : index
      %28 = vector.load %arg7[%c0_16, %c0_17, %c0_18] : memref<1x4x8xbf16, #tpu.memory_space<vmem>>, vector<1x4x8xbf16>
      %29 = vector.shape_cast %28 : vector<1x4x8xbf16> to vector<4x8xbf16>
      %cst_19 = arith.constant dense<0.000000e+00> : vector<4x128xf32>
      %30 = tpu.matmul %29, %23, %cst_19 {dimension_numbers = #tpu.dot_dimension_numbers<[1], [1], [0], [0], [0, 0, 1, 0], [], []>} : vector<4x8xbf16>, vector<128x8xbf16>, vector<4x128xf32> -> vector<4x128xf32>
      %c0_20 = arith.constant 0 : index
      %c0_21 = arith.constant 0 : index
      %c0_22 = arith.constant 0 : index
      %31 = vector.load %arg10[%c0_20, %c0_21, %c0_22] : memref<1x32x128xi8, #tpu.memory_space<vmem>>, vector<1x32x128xi8>
      %32 = vector.shape_cast %31 : vector<1x32x128xi8> to vector<32x128xi8>
      %33 = arith.extsi %32 : vector<32x128xi8> to vector<32x128xi32>
      %c0_i32_23 = arith.constant 0 : i32
      %34 = vector.broadcast %c0_i32_23 : i32 to vector<32x128xi32>
      %35 = arith.cmpi sgt, %33, %34 : vector<32x128xi32>
      %c0_24 = arith.constant 0 : index
      %c0_25 = arith.constant 0 : index
      %c0_26 = arith.constant 0 : index
      %36 = vector.load %arg12[%c0_24, %c0_25, %c0_26] : memref<4x32x1xf32, #tpu.memory_space<vmem>>, vector<4x32x1xf32>
      %37 = vector.shape_cast %30 : vector<4x128xf32> to vector<4x1x128xf32>
      %38 = vector.broadcast %36 : vector<4x32x1xf32> to vector<4x32x128xf32>
      %39 = vector.broadcast %37 : vector<4x1x128xf32> to vector<4x32x128xf32>
      %40 = arith.addf %38, %39 : vector<4x32x128xf32>
      %cst_27 = arith.constant 2.000000e-01 : f32
      %41 = vector.broadcast %cst_27 : f32 to vector<4x32x128xf32>
      %42 = arith.mulf %41, %40 : vector<4x32x128xf32>
      %43 = arith.maximumf %40, %42 : vector<4x32x128xf32>
      %44 = vector.shape_cast %35 : vector<32x128xi1> to vector<1x32x128xi1>
      %45 = vector.shape_cast %44 : vector<1x32x128xi1> to vector<1x32x128xi1>
      %46 = vector.broadcast %45 : vector<1x32x128xi1> to vector<4x32x128xi1>
      %47 = vector.broadcast %cst_4 : f32 to vector<4x32x128xf32>
      %48 = arith.select %46, %43, %47 : vector<4x32x128xi1>, vector<4x32x128xf32>
      %c0_28 = arith.constant 0 : index
      %c0_29 = arith.constant 0 : index
      %c0_30 = arith.constant 0 : index
      %49 = vector.load %arg13[%c0_28, %c0_29, %c0_30] : memref<4x32x1xf32, #tpu.memory_space<vmem>>, vector<4x32x1xf32>
      %cst_31 = arith.constant dense<0xFF800000> : vector<4x32xf32>
      %50 = vector.multi_reduction <maximumf>, %48, %cst_31 [2] : vector<4x32x128xf32> to vector<4x32xf32>
      %51 = vector.shape_cast %50 : vector<4x32xf32> to vector<4x32x1xf32>
      %52 = arith.maximumf %49, %51 : vector<4x32x1xf32>
      %53 = vector.broadcast %52 : vector<4x32x1xf32> to vector<4x32x128xf32>
      %54 = arith.subf %48, %53 : vector<4x32x128xf32>
      %55 = math.exp %54 : vector<4x32x128xf32>
      %56 = arith.subf %49, %52 : vector<4x32x1xf32>
      %57 = math.exp %56 : vector<4x32x1xf32>
      %c0_32 = arith.constant 0 : index
      %c0_33 = arith.constant 0 : index
      %c0_34 = arith.constant 0 : index
      %58 = vector.load %arg14[%c0_32, %c0_33, %c0_34] : memref<4x32x1xf32, #tpu.memory_space<vmem>>, vector<4x32x1xf32>
      %59 = arith.mulf %57, %58 : vector<4x32x1xf32>
      %cst_35 = arith.constant dense<0.000000e+00> : vector<4x32xf32>
      %60 = vector.multi_reduction <add>, %55, %cst_35 [2] : vector<4x32x128xf32> to vector<4x32xf32>
      %61 = vector.shape_cast %60 : vector<4x32xf32> to vector<4x32x1xf32>
      %62 = arith.addf %59, %61 : vector<4x32x1xf32>
      %c0_36 = arith.constant 0 : index
      %c0_37 = arith.constant 0 : index
      %c0_38 = arith.constant 0 : index
      %63 = vector.load %arg14[%c0_36, %c0_37, %c0_38] : memref<4x32x1xf32, #tpu.memory_space<vmem>>, vector<4x32x1xf32>
      tpu.vector_store %arg14[%c0_36, %c0_37, %c0_38], %62 {strides = array<i32>} : memref<4x32x1xf32, #tpu.memory_space<vmem>>, vector<4x32x1xf32>,
      %64 = arith.truncf %55 : vector<4x32x128xf32> to vector<4x32x128xbf16>
      %65 = vector.extract_strided_slice %57 {offsets = [0, 0, 0], sizes = [1, 32, 1], strides = [1, 1, 1]} : vector<4x32x1xf32> to vector<1x32x1xf32>
      %66 = vector.shape_cast %65 : vector<1x32x1xf32> to vector<32x1xf32>
      %c0_39 = arith.constant 0 : index
      %c0_40 = arith.constant 0 : index
      %c0_41 = arith.constant 0 : index
      %67 = vector.load %arg15[%c0_39, %c0_40, %c0_41] : memref<4x32x8xf32, #tpu.memory_space<vmem>>, vector<1x32x8xf32>
      %68 = vector.shape_cast %67 : vector<1x32x8xf32> to vector<32x8xf32>
      %69 = vector.broadcast %66 : vector<32x1xf32> to vector<32x8xf32>
      %70 = arith.mulf %69, %68 : vector<32x8xf32>
      %71 = vector.extract_strided_slice %64 {offsets = [0, 0, 0], sizes = [1, 32, 128], strides = [1, 1, 1]} : vector<4x32x128xbf16> to vector<1x32x128xbf16>
      %72 = vector.shape_cast %71 : vector<1x32x128xbf16> to vector<32x128xbf16>
      %73 = vector.extract_strided_slice %27 {offsets = [0, 0], sizes = [128, 8], strides = [1, 1]} : vector<128x32xbf16> to vector<128x8xbf16>
      %cst_42 = arith.constant dense<0.000000e+00> : vector<32x8xf32>
      %74 = tpu.matmul %72, %73, %cst_42 {dimension_numbers = #tpu.dot_dimension_numbers<[1], [0], [0], [1], [0, 0, 1, 1], [], []>} : vector<32x128xbf16>, vector<128x8xbf16>, vector<32x8xf32> -> vector<32x8xf32>
      %75 = arith.addf %70, %74 : vector<32x8xf32>
      %c0_43 = arith.constant 0 : index
      %c0_44 = arith.constant 0 : index
      %c0_45 = arith.constant 0 : index
      %76 = vector.load %arg15[%c0_43, %c0_44, %c0_45] : memref<4x32x8xf32, #tpu.memory_space<vmem>>, vector<1x32x8xf32>
      %77 = vector.shape_cast %76 : vector<1x32x8xf32> to vector<32x8xf32>
      %78 = vector.shape_cast %75 : vector<32x8xf32> to vector<1x32x8xf32>
      tpu.vector_store %arg15[%c0_43, %c0_44, %c0_45], %78 {strides = array<i32>} : memref<4x32x8xf32, #tpu.memory_space<vmem>>, vector<1x32x8xf32>,
      %79 = vector.extract_strided_slice %57 {offsets = [1, 0, 0], sizes = [1, 32, 1], strides = [1, 1, 1]} : vector<4x32x1xf32> to vector<1x32x1xf32>
      %80 = vector.shape_cast %79 : vector<1x32x1xf32> to vector<32x1xf32>
      %c1 = arith.constant 1 : index
      %c0_46 = arith.constant 0 : index
      %c0_47 = arith.constant 0 : index
      %81 = vector.load %arg15[%c1, %c0_46, %c0_47] : memref<4x32x8xf32, #tpu.memory_space<vmem>>, vector<1x32x8xf32>
      %82 = vector.shape_cast %81 : vector<1x32x8xf32> to vector<32x8xf32>
      %83 = vector.broadcast %80 : vector<32x1xf32> to vector<32x8xf32>
      %84 = arith.mulf %83, %82 : vector<32x8xf32>
      %85 = vector.extract_strided_slice %64 {offsets = [1, 0, 0], sizes = [1, 32, 128], strides = [1, 1, 1]} : vector<4x32x128xbf16> to vector<1x32x128xbf16>
      %86 = vector.shape_cast %85 : vector<1x32x128xbf16> to vector<32x128xbf16>
      %87 = vector.extract_strided_slice %27 {offsets = [0, 8], sizes = [128, 8], strides = [1, 1]} : vector<128x32xbf16> to vector<128x8xbf16>
      %cst_48 = arith.constant dense<0.000000e+00> : vector<32x8xf32>
      %88 = tpu.matmul %86, %87, %cst_48 {dimension_numbers = #tpu.dot_dimension_numbers<[1], [0], [0], [1], [0, 0, 1, 1], [], []>} : vector<32x128xbf16>, vector<128x8xbf16>, vector<32x8xf32> -> vector<32x8xf32>
      %89 = arith.addf %84, %88 : vector<32x8xf32>
      %c1_49 = arith.constant 1 : index
      %c0_50 = arith.constant 0 : index
      %c0_51 = arith.constant 0 : index
      %90 = vector.load %arg15[%c1_49, %c0_50, %c0_51] : memref<4x32x8xf32, #tpu.memory_space<vmem>>, vector<1x32x8xf32>
      %91 = vector.shape_cast %90 : vector<1x32x8xf32> to vector<32x8xf32>
      %92 = vector.shape_cast %89 : vector<32x8xf32> to vector<1x32x8xf32>
      tpu.vector_store %arg15[%c1_49, %c0_50, %c0_51], %92 {strides = array<i32>} : memref<4x32x8xf32, #tpu.memory_space<vmem>>, vector<1x32x8xf32>,
      %93 = vector.extract_strided_slice %57 {offsets = [2, 0, 0], sizes = [1, 32, 1], strides = [1, 1, 1]} : vector<4x32x1xf32> to vector<1x32x1xf32>
      %94 = vector.shape_cast %93 : vector<1x32x1xf32> to vector<32x1xf32>
      %c2 = arith.constant 2 : index
      %c0_52 = arith.constant 0 : index
      %c0_53 = arith.constant 0 : index
      %95 = vector.load %arg15[%c2, %c0_52, %c0_53] : memref<4x32x8xf32, #tpu.memory_space<vmem>>, vector<1x32x8xf32>
      %96 = vector.shape_cast %95 : vector<1x32x8xf32> to vector<32x8xf32>
      %97 = vector.broadcast %94 : vector<32x1xf32> to vector<32x8xf32>
      %98 = arith.mulf %97, %96 : vector<32x8xf32>
      %99 = vector.extract_strided_slice %64 {offsets = [2, 0, 0], sizes = [1, 32, 128], strides = [1, 1, 1]} : vector<4x32x128xbf16> to vector<1x32x128xbf16>
      %100 = vector.shape_cast %99 : vector<1x32x128xbf16> to vector<32x128xbf16>
      %101 = vector.extract_strided_slice %27 {offsets = [0, 16], sizes = [128, 8], strides = [1, 1]} : vector<128x32xbf16> to vector<128x8xbf16>
      %cst_54 = arith.constant dense<0.000000e+00> : vector<32x8xf32>
      %102 = tpu.matmul %100, %101, %cst_54 {dimension_numbers = #tpu.dot_dimension_numbers<[1], [0], [0], [1], [0, 0, 1, 1], [], []>} : vector<32x128xbf16>, vector<128x8xbf16>, vector<32x8xf32> -> vector<32x8xf32>
      %103 = arith.addf %98, %102 : vector<32x8xf32>
      %c2_55 = arith.constant 2 : index
      %c0_56 = arith.constant 0 : index
      %c0_57 = arith.constant 0 : index
      %104 = vector.load %arg15[%c2_55, %c0_56, %c0_57] : memref<4x32x8xf32, #tpu.memory_space<vmem>>, vector<1x32x8xf32>
      %105 = vector.shape_cast %104 : vector<1x32x8xf32> to vector<32x8xf32>
      %106 = vector.shape_cast %103 : vector<32x8xf32> to vector<1x32x8xf32>
      tpu.vector_store %arg15[%c2_55, %c0_56, %c0_57], %106 {strides = array<i32>} : memref<4x32x8xf32, #tpu.memory_space<vmem>>, vector<1x32x8xf32>,
      %107 = vector.extract_strided_slice %57 {offsets = [3, 0, 0], sizes = [1, 32, 1], strides = [1, 1, 1]} : vector<4x32x1xf32> to vector<1x32x1xf32>
      %108 = vector.shape_cast %107 : vector<1x32x1xf32> to vector<32x1xf32>
      %c3 = arith.constant 3 : index
      %c0_58 = arith.constant 0 : index
      %c0_59 = arith.constant 0 : index
      %109 = vector.load %arg15[%c3, %c0_58, %c0_59] : memref<4x32x8xf32, #tpu.memory_space<vmem>>, vector<1x32x8xf32>
      %110 = vector.shape_cast %109 : vector<1x32x8xf32> to vector<32x8xf32>
      %111 = vector.broadcast %108 : vector<32x1xf32> to vector<32x8xf32>
      %112 = arith.mulf %111, %110 : vector<32x8xf32>
      %113 = vector.extract_strided_slice %64 {offsets = [3, 0, 0], sizes = [1, 32, 128], strides = [1, 1, 1]} : vector<4x32x128xbf16> to vector<1x32x128xbf16>
      %114 = vector.shape_cast %113 : vector<1x32x128xbf16> to vector<32x128xbf16>
      %115 = vector.extract_strided_slice %27 {offsets = [0, 24], sizes = [128, 8], strides = [1, 1]} : vector<128x32xbf16> to vector<128x8xbf16>
      %cst_60 = arith.constant dense<0.000000e+00> : vector<32x8xf32>
      %116 = tpu.matmul %114, %115, %cst_60 {dimension_numbers = #tpu.dot_dimension_numbers<[1], [0], [0], [1], [0, 0, 1, 1], [], []>} : vector<32x128xbf16>, vector<128x8xbf16>, vector<32x8xf32> -> vector<32x8xf32>
      %117 = arith.addf %112, %116 : vector<32x8xf32>
      %c3_61 = arith.constant 3 : index
      %c0_62 = arith.constant 0 : index
      %c0_63 = arith.constant 0 : index
      %118 = vector.load %arg15[%c3_61, %c0_62, %c0_63] : memref<4x32x8xf32, #tpu.memory_space<vmem>>, vector<1x32x8xf32>
      %119 = vector.shape_cast %118 : vector<1x32x8xf32> to vector<32x8xf32>
      %120 = vector.shape_cast %117 : vector<32x8xf32> to vector<1x32x8xf32>
      tpu.vector_store %arg15[%c3_61, %c0_62, %c0_63], %120 {strides = array<i32>} : memref<4x32x8xf32, #tpu.memory_space<vmem>>, vector<1x32x8xf32>,
      %c0_64 = arith.constant 0 : index
      %c0_65 = arith.constant 0 : index
      %c0_66 = arith.constant 0 : index
      %121 = vector.load %arg13[%c0_64, %c0_65, %c0_66] : memref<4x32x1xf32, #tpu.memory_space<vmem>>, vector<4x32x1xf32>
      tpu.vector_store %arg13[%c0_64, %c0_65, %c0_66], %52 {strides = array<i32>} : memref<4x32x1xf32, #tpu.memory_space<vmem>>, vector<4x32x1xf32>,
    } else {
    }
    %c1_i32 = arith.constant 1 : i32
    %13 = arith.subi %1, %c1_i32 : i32
    %14 = arith.cmpi eq, %arg2, %13 : i32
    %15 = arith.extui %14 : i1 to i32
    %c0_i32_6 = arith.constant 0 : i32
    %16 = arith.cmpi ne, %15, %c0_i32_6 : i32
    scf.if %16 {
      %c0 = arith.constant 0 : index
      %c0_10 = arith.constant 0 : index
      %c0_11 = arith.constant 0 : index
      %22 = vector.load %arg14[%c0, %c0_10, %c0_11] : memref<4x32x1xf32, #tpu.memory_space<vmem>>, vector<4x32x1xf32>
      %cst_12 = arith.constant 9.99999968E-21 : f32
      %23 = vector.broadcast %cst_12 : f32 to vector<4x32x1xf32>
      %24 = arith.maximumf %22, %23 : vector<4x32x1xf32>
      %25 = tpu.reciprocal %24 {approx = true} : vector<4x32x1xf32> -> vector<4x32x1xf32>
      %c0_13 = arith.constant 0 : index
      %c0_14 = arith.constant 0 : index
      %c0_15 = arith.constant 0 : index
      %26 = vector.load %arg15[%c0_13, %c0_14, %c0_15] : memref<4x32x8xf32, #tpu.memory_space<vmem>>, vector<1x32x8xf32>
      %27 = vector.shape_cast %26 : vector<1x32x8xf32> to vector<32x8xf32>
      %28 = vector.extract_strided_slice %25 {offsets = [0, 0, 0], sizes = [1, 32, 1], strides = [1, 1, 1]} : vector<4x32x1xf32> to vector<1x32x1xf32>
      %29 = vector.shape_cast %28 : vector<1x32x1xf32> to vector<32x1xf32>
      %30 = vector.broadcast %29 : vector<32x1xf32> to vector<32x8xf32>
      %31 = arith.mulf %27, %30 : vector<32x8xf32>
      %c1 = arith.constant 1 : index
      %c0_16 = arith.constant 0 : index
      %c0_17 = arith.constant 0 : index
      %32 = vector.load %arg15[%c1, %c0_16, %c0_17] : memref<4x32x8xf32, #tpu.memory_space<vmem>>, vector<1x32x8xf32>
      %33 = vector.shape_cast %32 : vector<1x32x8xf32> to vector<32x8xf32>
      %34 = vector.extract_strided_slice %25 {offsets = [1, 0, 0], sizes = [1, 32, 1], strides = [1, 1, 1]} : vector<4x32x1xf32> to vector<1x32x1xf32>
      %35 = vector.shape_cast %34 : vector<1x32x1xf32> to vector<32x1xf32>
      %36 = vector.broadcast %35 : vector<32x1xf32> to vector<32x8xf32>
      %37 = arith.mulf %33, %36 : vector<32x8xf32>
      %c2 = arith.constant 2 : index
      %c0_18 = arith.constant 0 : index
      %c0_19 = arith.constant 0 : index
      %38 = vector.load %arg15[%c2, %c0_18, %c0_19] : memref<4x32x8xf32, #tpu.memory_space<vmem>>, vector<1x32x8xf32>
      %39 = vector.shape_cast %38 : vector<1x32x8xf32> to vector<32x8xf32>
      %40 = vector.extract_strided_slice %25 {offsets = [2, 0, 0], sizes = [1, 32, 1], strides = [1, 1, 1]} : vector<4x32x1xf32> to vector<1x32x1xf32>
      %41 = vector.shape_cast %40 : vector<1x32x1xf32> to vector<32x1xf32>
      %42 = vector.broadcast %41 : vector<32x1xf32> to vector<32x8xf32>
      %43 = arith.mulf %39, %42 : vector<32x8xf32>
      %c3 = arith.constant 3 : index
      %c0_20 = arith.constant 0 : index
      %c0_21 = arith.constant 0 : index
      %44 = vector.load %arg15[%c3, %c0_20, %c0_21] : memref<4x32x8xf32, #tpu.memory_space<vmem>>, vector<1x32x8xf32>
      %45 = vector.shape_cast %44 : vector<1x32x8xf32> to vector<32x8xf32>
      %46 = vector.extract_strided_slice %25 {offsets = [3, 0, 0], sizes = [1, 32, 1], strides = [1, 1, 1]} : vector<4x32x1xf32> to vector<1x32x1xf32>
      %47 = vector.shape_cast %46 : vector<1x32x1xf32> to vector<32x1xf32>
      %48 = vector.broadcast %47 : vector<32x1xf32> to vector<32x8xf32>
      %49 = arith.mulf %45, %48 : vector<32x8xf32>
      %50 = tpu.concatenate %31, %37, %43, %49 in 1 : vector<32x8xf32>, vector<32x8xf32>, vector<32x8xf32>, vector<32x8xf32> -> vector<32x32xf32>
      %c0_22 = arith.constant 0 : index
      %c0_23 = arith.constant 0 : index
      %51 = vector.load %arg11[%c0_22, %c0_23] : memref<32x32xf32, #tpu.memory_space<vmem>>, vector<32x32xf32>
      %c0_24 = arith.constant 0 : index
      %c0_25 = arith.constant 0 : index
      %c0_26 = arith.constant 0 : index
      %52 = vector.load %arg9[%c0_24, %c0_25, %c0_26] : memref<1x1x32xf32, #tpu.memory_space<vmem>>, vector<1x1x32xf32>
      %53 = vector.shape_cast %52 : vector<1x1x32xf32> to vector<1x32xf32>
      %54 = vector.broadcast %53 : vector<1x32xf32> to vector<32x32xf32>
      %55 = arith.addf %50, %54 : vector<32x32xf32>
      %56 = arith.addf %51, %55 : vector<32x32xf32>
      %c0_27 = arith.constant 0 : index
      %c0_28 = arith.constant 0 : index
      %57 = vector.load %arg11[%c0_27, %c0_28] : memref<32x32xf32, #tpu.memory_space<vmem>>, vector<32x32xf32>
      tpu.vector_store %arg11[%c0_27, %c0_28], %56 {strides = array<i32>} : memref<32x32xf32, #tpu.memory_space<vmem>>, vector<32x32xf32>,
    } else {
    }
    %c0_i32_7 = arith.constant 0 : i32
    %17 = arith.cmpi eq, %arg1, %c0_i32_7 : i32
    %c1_i32_8 = arith.constant 1 : i32
    %18 = arith.cmpi eq, %arg2, %c1_i32_8 : i32
    %19 = arith.andi %17, %18 : i1
    %20 = arith.extui %19 : i1 to i32
    %c0_i32_9 = arith.constant 0 : i32
    %21 = arith.cmpi ne, %20, %c0_i32_9 : i32
    scf.if %21 {
      %c0 = arith.constant 0 : index
      %c0_10 = arith.constant 0 : index
      %22 = vector.load %arg11[%c0, %c0_10] : memref<32x32xf32, #tpu.memory_space<vmem>>, vector<32x32xf32>
      %cst_11 = arith.constant 0.000000e+00 : f32
      %23 = vector.broadcast %cst_11 : f32 to vector<32x32xf32>
      %24 = arith.cmpf ogt, %22, %23 : vector<32x32xf32>
      %cst_12 = arith.constant 0.000000e+00 : f32
      %25 = vector.broadcast %cst_12 : f32 to vector<32x32xf32>
      %26 = arith.minimumf %22, %25 : vector<32x32xf32>
      %27 = math.exp %26 : vector<32x32xf32>
      %cst_13 = arith.constant 1.000000e+00 : f32
      %28 = vector.broadcast %cst_13 : f32 to vector<32x32xf32>
      %29 = arith.subf %27, %28 : vector<32x32xf32>
      %30 = arith.select %24, %22, %29 : vector<32x32xi1>, vector<32x32xf32>
      %c0_14 = arith.constant 0 : index
      %c0_15 = arith.constant 0 : index
      %31 = vector.load %arg11[%c0_14, %c0_15] : memref<32x32xf32, #tpu.memory_space<vmem>>, vector<32x32xf32>
      tpu.vector_store %arg11[%c0_14, %c0_15], %30 {strides = array<i32>} : memref<32x32xf32, #tpu.memory_space<vmem>>, vector<32x32xf32>,
    } else {
    }
    return
  }
  func.func @transform_0(%arg0: i32, %arg1: i32, %arg2: i32, %arg3: memref<1xi32, #tpu.memory_space<smem>>) -> (i32, i32) {
    %c0_i32 = arith.constant 0 : i32
    %c0_i32_0 = arith.constant 0 : i32
    return %arg0, %c0_i32 : i32, i32
  }
  func.func @transform_1(%arg0: i32, %arg1: i32, %arg2: i32, %arg3: memref<1xi32, #tpu.memory_space<smem>>) -> (i32, i32, i32) {
    %0 = arith.index_cast %arg1 : i32 to index
    %1 = memref.load %arg3[%0] : memref<1xi32, #tpu.memory_space<smem>>
    %c1_i32 = arith.constant 1 : i32
    %2 = arith.subi %1, %c1_i32 : i32
    %3 = arith.minsi %arg2, %2 : i32
    %c0_i32 = arith.constant 0 : i32
    %c0_i32_0 = arith.constant 0 : i32
    return %arg1, %3, %c0_i32 : i32, i32, i32
  }
  func.func @transform_2(%arg0: i32, %arg1: i32, %arg2: i32, %arg3: memref<1xi32, #tpu.memory_space<smem>>) -> (i32, i32, i32) {
    %c0_i32 = arith.constant 0 : i32
    %c0_i32_0 = arith.constant 0 : i32
    %c0_i32_1 = arith.constant 0 : i32
    return %arg1, %c0_i32, %c0_i32_0 : i32, i32, i32
  }
  func.func @transform_3(%arg0: i32, %arg1: i32, %arg2: i32, %arg3: memref<1xi32, #tpu.memory_space<smem>>) -> (i32, i32, i32) {
    %c0_i32 = arith.constant 0 : i32
    %c0_i32_0 = arith.constant 0 : i32
    %c0_i32_1 = arith.constant 0 : i32
    return %arg1, %c0_i32, %c0_i32_0 : i32, i32, i32
  }
  func.func @transform_4(%arg0: i32, %arg1: i32, %arg2: i32, %arg3: memref<1xi32, #tpu.memory_space<smem>>) -> (i32, i32, i32, i32) {
    %c0_i32 = arith.constant 0 : i32
    %c0_i32_0 = arith.constant 0 : i32
    %c0_i32_1 = arith.constant 0 : i32
    %c0_i32_2 = arith.constant 0 : i32
    return %arg1, %c0_i32, %c0_i32_0, %c0_i32_1 : i32, i32, i32, i32
  }
  func.func @transform_5(%arg0: i32, %arg1: i32, %arg2: i32, %arg3: memref<1xi32, #tpu.memory_space<smem>>) -> (i32, i32, i32) {
    %c0_i32 = arith.constant 0 : i32
    %c0_i32_0 = arith.constant 0 : i32
    %c0_i32_1 = arith.constant 0 : i32
    return %arg1, %c0_i32, %c0_i32_0 : i32, i32, i32
  }
  func.func @transform_6(%arg0: i32, %arg1: i32, %arg2: i32, %arg3: memref<1xi32, #tpu.memory_space<smem>>) -> (i32, i32, i32) {
    %0 = arith.index_cast %arg1 : i32 to index
    %1 = memref.load %arg3[%0] : memref<1xi32, #tpu.memory_space<smem>>
    %c1_i32 = arith.constant 1 : i32
    %2 = arith.subi %1, %c1_i32 : i32
    %3 = arith.minsi %arg2, %2 : i32
    %c0_i32 = arith.constant 0 : i32
    return %arg1, %arg0, %3 : i32, i32, i32
  }
  func.func @transform_7(%arg0: i32, %arg1: i32, %arg2: i32, %arg3: memref<1xi32, #tpu.memory_space<smem>>) -> (i32, i32) {
    %c0_i32 = arith.constant 0 : i32
    %c0_i32_0 = arith.constant 0 : i32
    return %arg0, %c0_i32 : i32, i32
  }
}

</mosaic_0001>

<llo_original>
// kernel: tpu_custom_call.1
$region0: #{tpu_custom_call.1}
  #allocation0 [shape = 'u32[]', space=smem, size = 0x4, offset = 0x4, fixed_abs, tag = 'smem constant byte address 0x4 - core index']
  #allocation1 [shape = 'u32[72,128]{1,0:T(1,128)}', space=vmem, size = 0x9000, scoped, tag = 'internal scratch']
  #allocation2 [shape = 'f32[4,32,1]{2,1,0:T(8,128)}', space=vmem, size = 0x10000, scoped, tag = 'scratch operand']
  #allocation3 [shape = 'f32[4,32,1]{2,1,0:T(8,128)}', space=vmem, size = 0x10000, scoped, tag = 'scratch operand']
  #allocation4 [shape = 'f32[4,32,1]{2,1,0:T(8,128)}', space=vmem, size = 0x10000, scoped, tag = 'scratch operand']
  #allocation5 [shape = 'f32[4,32,8]{2,1,0:T(8,128)}', space=vmem, size = 0x10000, scoped, tag = 'scratch operand']
  #allocation6 [shape = 's32[1]{0}', space=sflag, size = 0x4, scoped, tag = 'scoped memory for tpu_custom_call.1']
  #allocation7 [shape = 's32[1]{0:T(128)S(6)}', space=smem, size = 0x200, scoped, tag = 'prefetched SMEM operand 0']
  %s0 = inlined_call_operand.<no memory space> [shape: s32[1], index: 0, kind: input, shape index: {}]
  %s1 = inlined_call_operand.vmem [shape: bf16[32,8], index: 1, kind: input, shape index: {}]
  %s2 = inlined_call_operand.vmem [shape: bf16[1,256,8], index: 2, kind: input, shape index: {}]
  %s3 = inlined_call_operand.vmem [shape: bf16[1,8,32], index: 3, kind: input, shape index: {}]
  %s4 = inlined_call_operand.vmem [shape: bf16[1,4,8], index: 4, kind: input, shape index: {}]
  %s5 = inlined_call_operand.vmem [shape: f32[1,4,1,8], index: 5, kind: input, shape index: {}]
  %s6 = inlined_call_operand.vmem [shape: f32[1,1,32], index: 6, kind: input, shape index: {}]
  %s7 = inlined_call_operand.vmem [shape: s8[1,32,256], index: 7, kind: input, shape index: {}]
  %s8 = inlined_call_operand.hbm [shape: f32[32,32], index: 8, kind: output, shape index: {}]
  %s9 = sld [smem:[#allocation0]]
  $region81: #{tpu_custom_call.1} parent=0
    _
  %s11 = ssub.s32 1, %s9
  %s12 = scalar_select 0, %s11, %s9
  %13 = sst [smem:[#allocation7]] %s0
  $region1: #{tpu_custom_call.1} parent=0
    #allocation8 [shape = 'u8[16384]{0}', space=vmem, size = 0x4000, scoped, tag = 'output window, operand 0, single buffered']
    #allocation9 [shape = 's32[2]{0}', space=sflag, size = 0x8, scoped, tag = 'scoped memory for tpu_custom_call.1']
    %14 = vsyncpa [#allocation9], 0
    loop: start=0, step=1, limit=4
    $region2: #{tpu_custom_call.1} parent=1 // loop_pre_header
      _
    $region3: #{tpu_custom_call.1} parent=1 // loop_header
      %s16 = sphi 0, %s20
      %p17 = scmp.ge.s32.totalorder %s16, 4
      %s23 = sphi 0, %s42
      %s24 = sphi 0, %s38
      %s25 = sphi 0, %s34
      %s26 = sphi 0, %s23
      %s27 = sphi 0, %s24
      %s28 = sphi 0, %s25
      %s29 = sphi 0, %s26
      %s30 = sphi 0, %s27
      %s31 = sphi 0, %s28
      %s45 = sphi 0, %s47
      %s48 = sphi 0, %s45
      %s49 = sphi 0, %s48
      %s65 = sphi 0, %s49
      %s81 = sphi 0, %s83
      %s84 = sphi 0, %s81
      %s85 = sphi 0, %s84
      %s101 = sphi 0, %s85
      %s107 = sphi 0, %s109
      %s110 = sphi 0, %s107
      %s111 = sphi 0, %s110
      %s127 = sphi 0, %s111
      %s133 = sphi 0, %s135
      %s136 = sphi 0, %s133
      %s137 = sphi 0, %s136
      %s153 = sphi 0, %s137
      %s159 = sphi 0, %s161
      %s162 = sphi 0, %s159
      %s163 = sphi 0, %s162
      %s179 = sphi 0, %s163
      %s185 = sphi 0, %s187
      %s188 = sphi 0, %s185
      %s189 = sphi 0, %s188
      %s205 = sphi 0, %s189
      %s223 = sphi 0, %s225
      %s226 = sphi 0, %s223
      %s227 = sphi 0, %s226
      %s243 = sphi 0, %s227
      %s249 = sphi 0, %s251
      %s252 = sphi 0, %s249
      %s253 = sphi 0, %s252
      %s269 = sphi 0, %s253
    $region4: #{tpu_custom_call.1} parent=1 // loop_header_branch
      %19 = sbr.rel (%p17) target = $region8
    $region5: #{tpu_custom_call.1} parent=1 // loop_body
      %s21 = ssub.s32 %s16, 1
      %s22 = ssub.s32 %s16, 2
      %s32 = sadd.s32 1, %s25
      %p33 = scmp.ge.s32.totalorder %s32, 2
      %s34 = scalar_select %p33, 0, %s32
      %s35 = sadd.s32 1, %s24
      %s36 = scalar_select %p33, %s35, %s24
      %p37 = scmp.ge.s32.totalorder %s36, 1
      %s38 = scalar_select %p37, 0, %s36
      %s39 = sadd.s32 1, %s23
      %s40 = scalar_select %p37, %s39, %s23
      %p41 = scmp.ge.s32.totalorder %s40, 1
      %s42 = scalar_select %p41, 0, %s40
      %s43 = ssub.s32 %s23, %s42
      %p44 = scmp.eq.s32.totalorder %s43, 0
      %s46 = sadd.s32 %s45, 1
      %s47 = scalar_select %p44, %s45, %s46
      %p50 = pneg %p44
      %p51 = scmp.eq.s32.totalorder %s16, 1
      %p52 = por %p50, %p51
      %p53 = scmp.ne.s32.totalorder %s45, %s48
      %p54 = scmp.eq.s32.totalorder %s16, 0
      %p55 = por %p53, %p54
      %p56 = scmp.ne.s32.totalorder %s45, %s48
      %p57 = scmp.eq.s32.totalorder %s21, 1
      %p58 = por %p56, %p57
      %p59 = scmp.ne.s32.totalorder %s48, %s49
      %p60 = scmp.eq.s32.totalorder %s21, 0
      %p61 = por %p59, %p60
      %p62 = scmp.ne.s32.totalorder %s48, %s49
      %p63 = scmp.eq.s32.totalorder %s22, 1
      %p64 = por %p62, %p63
      %p66 = scmp.ne.s32.totalorder %s49, %s65
      %p67 = scmp.eq.s32.totalorder %s22, 0
      %p68 = por %p66, %p67
      %s69 = sld [smem:[#allocation7 + %s24]]
      %s70 = ssub.s32 %s69, 1
      %p71 = scmp.lt.s32.totalorder %s25, %s70
      %s72 = scalar_select %p71, %s25, %s70
      %s73 = sld [smem:[#allocation7 + %s38]]
      %s74 = ssub.s32 %s73, 1
      %p75 = scmp.lt.s32.totalorder %s34, %s74
      %s76 = scalar_select %p75, %s34, %s74
      %s77 = ssub.s32 %s24, %s38
      %s78 = ssub.s32 %s72, %s76
      %s79 = sor.u32 %s77, %s78
      %p80 = scmp.eq.s32.totalorder %s79, 0
      %s82 = sadd.s32 %s81, 1
      %s83 = scalar_select %p80, %s81, %s82
      %p86 = pneg %p80
      %p87 = scmp.eq.s32.totalorder %s16, 1
      %p88 = por %p86, %p87
      %p89 = scmp.ne.s32.totalorder %s81, %s84
      %p90 = scmp.eq.s32.totalorder %s16, 0
      %p91 = por %p89, %p90
      %p92 = scmp.ne.s32.totalorder %s81, %s84
      %p93 = scmp.eq.s32.totalorder %s21, 1
      %p94 = por %p92, %p93
      %p95 = scmp.ne.s32.totalorder %s84, %s85
      %p96 = scmp.eq.s32.totalorder %s21, 0
      %p97 = por %p95, %p96
      %p98 = scmp.ne.s32.totalorder %s84, %s85
      %p99 = scmp.eq.s32.totalorder %s22, 1
      %p100 = por %p98, %p99
      %p102 = scmp.ne.s32.totalorder %s85, %s101
      %p103 = scmp.eq.s32.totalorder %s22, 0
      %p104 = por %p102, %p103
      %s105 = ssub.s32 %s24, %s38
      %p106 = scmp.eq.s32.totalorder %s105, 0
      %s108 = sadd.s32 %s107, 1
      %s109 = scalar_select %p106, %s107, %s108
      %p112 = pneg %p106
      %p113 = scmp.eq.s32.totalorder %s16, 1
      %p114 = por %p112, %p113
      %p115 = scmp.ne.s32.totalorder %s107, %s110
      %p116 = scmp.eq.s32.totalorder %s16, 0
      %p117 = por %p115, %p116
      %p118 = scmp.ne.s32.totalorder %s107, %s110
      %p119 = scmp.eq.s32.totalorder %s21, 1
      %p120 = por %p118, %p119
      %p121 = scmp.ne.s32.totalorder %s110, %s111
      %p122 = scmp.eq.s32.totalorder %s21, 0
      %p123 = por %p121, %p122
      %p124 = scmp.ne.s32.totalorder %s110, %s111
      %p125 = scmp.eq.s32.totalorder %s22, 1
      %p126 = por %p124, %p125
      %p128 = scmp.ne.s32.totalorder %s111, %s127
      %p129 = scmp.eq.s32.totalorder %s22, 0
      %p130 = por %p128, %p129
      %s131 = ssub.s32 %s24, %s38
      %p132 = scmp.eq.s32.totalorder %s131, 0
      %s134 = sadd.s32 %s133, 1
      %s135 = scalar_select %p132, %s133, %s134
      %p138 = pneg %p132
      %p139 = scmp.eq.s32.totalorder %s16, 1
      %p140 = por %p138, %p139
      %p141 = scmp.ne.s32.totalorder %s133, %s136
      %p142 = scmp.eq.s32.totalorder %s16, 0
      %p143 = por %p141, %p142
      %p144 = scmp.ne.s32.totalorder %s133, %s136
      %p145 = scmp.eq.s32.totalorder %s21, 1
      %p146 = por %p144, %p145
      %p147 = scmp.ne.s32.totalorder %s136, %s137
      %p148 = scmp.eq.s32.totalorder %s21, 0
      %p149 = por %p147, %p148
      %p150 = scmp.ne.s32.totalorder %s136, %s137
      %p151 = scmp.eq.s32.totalorder %s22, 1
      %p152 = por %p150, %p151
      %p154 = scmp.ne.s32.totalorder %s137, %s153
      %p155 = scmp.eq.s32.totalorder %s22, 0
      %p156 = por %p154, %p155
      %s157 = ssub.s32 %s24, %s38
      %p158 = scmp.eq.s32.totalorder %s157, 0
      %s160 = sadd.s32 %s159, 1
      %s161 = scalar_select %p158, %s159, %s160
      %p164 = pneg %p158
      %p165 = scmp.eq.s32.totalorder %s16, 1
      %p166 = por %p164, %p165
      %p167 = scmp.ne.s32.totalorder %s159, %s162
      %p168 = scmp.eq.s32.totalorder %s16, 0
      %p169 = por %p167, %p168
      %p170 = scmp.ne.s32.totalorder %s159, %s162
      %p171 = scmp.eq.s32.totalorder %s21, 1
      %p172 = por %p170, %p171
      %p173 = scmp.ne.s32.totalorder %s162, %s163
      %p174 = scmp.eq.s32.totalorder %s21, 0
      %p175 = por %p173, %p174
      %p176 = scmp.ne.s32.totalorder %s162, %s163
      %p177 = scmp.eq.s32.totalorder %s22, 1
      %p178 = por %p176, %p177
      %p180 = scmp.ne.s32.totalorder %s163, %s179
      %p181 = scmp.eq.s32.totalorder %s22, 0
      %p182 = por %p180, %p181
      %s183 = ssub.s32 %s24, %s38
      %p184 = scmp.eq.s32.totalorder %s183, 0
      %s186 = sadd.s32 %s185, 1
      %s187 = scalar_select %p184, %s185, %s186
      %p190 = pneg %p184
      %p191 = scmp.eq.s32.totalorder %s16, 1
      %p192 = por %p190, %p191
      %p193 = scmp.ne.s32.totalorder %s185, %s188
      %p194 = scmp.eq.s32.totalorder %s16, 0
      %p195 = por %p193, %p194
      %p196 = scmp.ne.s32.totalorder %s185, %s188
      %p197 = scmp.eq.s32.totalorder %s21, 1
      %p198 = por %p196, %p197
      %p199 = scmp.ne.s32.totalorder %s188, %s189
      %p200 = scmp.eq.s32.totalorder %s21, 0
      %p201 = por %p199, %p200
      %p202 = scmp.ne.s32.totalorder %s188, %s189
      %p203 = scmp.eq.s32.totalorder %s22, 1
      %p204 = por %p202, %p203
      %p206 = scmp.ne.s32.totalorder %s189, %s205
      %p207 = scmp.eq.s32.totalorder %s22, 0
      %p208 = por %p206, %p207
      %s209 = sld [smem:[#allocation7 + %s24]]
      %s210 = ssub.s32 %s209, 1
      %p211 = scmp.lt.s32.totalorder %s25, %s210
      %s212 = scalar_select %p211, %s25, %s210
      %s213 = sld [smem:[#allocation7 + %s38]]
      %s214 = ssub.s32 %s213, 1
      %p215 = scmp.lt.s32.totalorder %s34, %s214
      %s216 = scalar_select %p215, %s34, %s214
      %s217 = ssub.s32 %s24, %s38
      %s218 = ssub.s32 %s23, %s42
      %s219 = sor.u32 %s217, %s218
      %s220 = ssub.s32 %s212, %s216
      %s221 = sor.u32 %s219, %s220
      %p222 = scmp.eq.s32.totalorder %s221, 0
      %s224 = sadd.s32 %s223, 1
      %s225 = scalar_select %p222, %s223, %s224
      %p228 = pneg %p222
      %p229 = scmp.eq.s32.totalorder %s16, 1
      %p230 = por %p228, %p229
      %p231 = scmp.ne.s32.totalorder %s223, %s226
      %p232 = scmp.eq.s32.totalorder %s16, 0
      %p233 = por %p231, %p232
      %p234 = scmp.ne.s32.totalorder %s223, %s226
      %p235 = scmp.eq.s32.totalorder %s21, 1
      %p236 = por %p234, %p235
      %p237 = scmp.ne.s32.totalorder %s226, %s227
      %p238 = scmp.eq.s32.totalorder %s21, 0
      %p239 = por %p237, %p238
      %p240 = scmp.ne.s32.totalorder %s226, %s227
      %p241 = scmp.eq.s32.totalorder %s22, 1
      %p242 = por %p240, %p241
      %p244 = scmp.ne.s32.totalorder %s227, %s243
      %p245 = scmp.eq.s32.totalorder %s22, 0
      %p246 = por %p244, %p245
      %s247 = ssub.s32 %s23, %s42
      %p248 = scmp.eq.s32.totalorder %s247, 0
      %s250 = sadd.s32 %s249, 1
      %s251 = scalar_select %p248, %s249, %s250
      %p254 = pneg %p248
      %p255 = scmp.eq.s32.totalorder %s16, 1
      %p256 = por %p254, %p255
      %p257 = scmp.ne.s32.totalorder %s249, %s252
      %p258 = scmp.eq.s32.totalorder %s16, 0
      %p259 = por %p257, %p258
      %p260 = scmp.ne.s32.totalorder %s249, %s252
      %p261 = scmp.eq.s32.totalorder %s21, 1
      %p262 = por %p260, %p261
      %p263 = scmp.ne.s32.totalorder %s252, %s253
      %p264 = scmp.eq.s32.totalorder %s21, 0
      %p265 = por %p263, %p264
      %p266 = scmp.ne.s32.totalorder %s252, %s253
      %p267 = scmp.eq.s32.totalorder %s22, 1
      %p268 = por %p266, %p267
      %p270 = scmp.ne.s32.totalorder %s253, %s269
      %p271 = scmp.eq.s32.totalorder %s22, 0
      %p272 = por %p270, %p271
      %p273 = scmp.le.s32.totalorder 1, %s16
      %p274 = scmp.lt.s32.totalorder %s16, 3
      %p275 = pnand %p273, %p274
      %p276 = pneg %p275
      // Predicated region
      $region9: #{tpu_custom_call.1} parent=5 // pred_check
        _
      $region10: #{tpu_custom_call.1} parent=5 // pred_check_branch
        %278 = sbr.rel (%p275) target = $region12
      $region11: #{tpu_custom_call.1} parent=5 // pred_region
        %s279 = ssub.s32 %s16, 1
        // Predicated region
        $region13: #{tpu_custom_call.1} parent=11 // pred_check
          %p280 = pneg %p61
        $region14: #{tpu_custom_call.1} parent=11 // pred_check_branch
          %282 = sbr.rel (%p280) target = $region16
        $region15: #{tpu_custom_call.1} parent=11 // pred_region
          %s283 = smul.u32 4, %s26
          %p284 = scmp.lt.s32.totalorder %s283, 3
          %s285 = scalar_select %p284, %s283, 3
          %s286 = smul.addr %s285, 4
          %s287 = scalar_lea.vmem %s1, %s286
          %s288 = smul.u32 4, %s26
        $region16: #{tpu_custom_call.1} parent=11 // pred_fallthru
          _
        // Predicated region
        $region17: #{tpu_custom_call.1} parent=11 // pred_check
          %p289 = pneg %p123
        $region18: #{tpu_custom_call.1} parent=11 // pred_check_branch
          %291 = sbr.rel (%p289) target = $region20
        $region19: #{tpu_custom_call.1} parent=11 // pred_region
          %p292 = scmp.lt.s32.totalorder %s27, 0
          %s293 = scalar_select %p292, %s27, 0
          %s294 = smul.addr %s293, 4
          %s295 = scalar_lea.vmem %s3, %s294
        $region20: #{tpu_custom_call.1} parent=11 // pred_fallthru
          _
        // Predicated region
        $region21: #{tpu_custom_call.1} parent=11 // pred_check
          %p296 = pneg %p149
        $region22: #{tpu_custom_call.1} parent=11 // pred_check_branch
          %298 = sbr.rel (%p296) target = $region24
        $region23: #{tpu_custom_call.1} parent=11 // pred_region
          %p299 = scmp.lt.s32.totalorder %s27, 0
          %s300 = scalar_select %p299, %s27, 0
          %s301 = smul.addr %s300, 2
          %s302 = scalar_lea.vmem %s4, %s301
        $region24: #{tpu_custom_call.1} parent=11 // pred_fallthru
          _
        // Predicated region
        $region25: #{tpu_custom_call.1} parent=11 // pred_check
          %p303 = pneg %p175
        $region26: #{tpu_custom_call.1} parent=11 // pred_check_branch
          %305 = sbr.rel (%p303) target = $region28
        $region27: #{tpu_custom_call.1} parent=11 // pred_region
          %p306 = scmp.lt.s32.totalorder %s27, 0
          %s307 = scalar_select %p306, %s27, 0
          %s308 = smul.addr %s307, 4
          %s309 = scalar_lea.vmem %s5, %s308
        $region28: #{tpu_custom_call.1} parent=11 // pred_fallthru
          _
        // Predicated region
        $region29: #{tpu_custom_call.1} parent=11 // pred_check
          %p310 = pneg %p201
        $region30: #{tpu_custom_call.1} parent=11 // pred_check_branch
          %312 = sbr.rel (%p310) target = $region32
        $region31: #{tpu_custom_call.1} parent=11 // pred_region
          %p313 = scmp.lt.s32.totalorder %s27, 0
          %s314 = scalar_select %p313, %s27, 0
          %s315 = scalar_lea.vmem %s6, %s314
        $region32: #{tpu_custom_call.1} parent=11 // pred_fallthru
          _
      $region12: #{tpu_custom_call.1} parent=5 // pred_fallthru
        _
      %p316 = scmp.lt.s32.totalorder %s16, 2
      // Predicated region
      $region33: #{tpu_custom_call.1} parent=5 // pred_check
        %p317 = pneg %p316
      $region34: #{tpu_custom_call.1} parent=5 // pred_check_branch
        %319 = sbr.rel (%p317) target = $region36
      $region35: #{tpu_custom_call.1} parent=5 // pred_region
        // Predicated region
        $region37: #{tpu_custom_call.1} parent=35 // pred_check
          %p320 = pneg %p91
        $region38: #{tpu_custom_call.1} parent=35 // pred_check_branch
          %322 = sbr.rel (%p320) target = $region40
        $region39: #{tpu_custom_call.1} parent=35 // pred_region
          %s323 = sld [smem:[#allocation7 + %s24]]
          %s324 = ssub.s32 %s323, 1
          %p325 = scmp.lt.s32.totalorder %s25, %s324
          %s326 = scalar_select %p325, %s25, %s324
          %s327 = smul.u32 16, %s326
          %p328 = scmp.lt.s32.totalorder %s24, 0
          %s329 = scalar_select %p328, %s24, 0
          %p330 = scmp.lt.s32.totalorder %s327, 31
          %s331 = scalar_select %p330, %s327, 31
          %s332 = smul.addr %s329, 32
          %s333 = sadd.s32 %s331, %s332
          %s334 = smul.addr %s333, 4
          %s335 = scalar_lea.vmem %s2, %s334
          %s336 = sld [smem:[#allocation7 + %s24]]
          %s337 = ssub.s32 %s336, 1
          %p338 = scmp.lt.s32.totalorder %s25, %s337
          %s339 = scalar_select %p338, %s25, %s337
          %s340 = smul.u32 16, %s339
        $region40: #{tpu_custom_call.1} parent=35 // pred_fallthru
          _
        // Predicated region
        $region41: #{tpu_custom_call.1} parent=35 // pred_check
          %p341 = pneg %p233
        $region42: #{tpu_custom_call.1} parent=35 // pred_check_branch
          %343 = sbr.rel (%p341) target = $region44
        $region43: #{tpu_custom_call.1} parent=35 // pred_region
          %s344 = sld [smem:[#allocation7 + %s24]]
          %s345 = ssub.s32 %s344, 1
          %p346 = scmp.lt.s32.totalorder %s25, %s345
          %s347 = scalar_select %p346, %s25, %s345
          %p348 = scmp.lt.s32.totalorder %s24, 0
          %s349 = scalar_select %p348, %s24, 0
          %p350 = scmp.lt.s32.totalorder %s23, 0
          %s351 = scalar_select %p350, %s23, 0
          %p352 = scmp.lt.s32.totalorder %s347, 1
          %s353 = scalar_select %p352, %s347, 1
          %s354 = smul.addr %s351, 2
          %s355 = sadd.s32 %s353, %s354
          %s356 = smul.addr %s349, 2
          %s357 = sadd.s32 %s355, %s356
          %s358 = smul.addr %s357, 8
          %s359 = scalar_lea.vmem %s7, %s358
          %s360 = sld [smem:[#allocation7 + %s24]]
          %s361 = ssub.s32 %s360, 1
          %p362 = scmp.lt.s32.totalorder %s25, %s361
          %s363 = scalar_select %p362, %s25, %s361
        $region44: #{tpu_custom_call.1} parent=35 // pred_fallthru
          _
      $region36: #{tpu_custom_call.1} parent=5 // pred_fallthru
        _
      %p364 = scmp.le.s32.totalorder 1, %s16
      %p365 = scmp.lt.s32.totalorder %s16, 3
      %p366 = pnand %p364, %p365
      %p367 = pneg %p366
      // Predicated region
      $region45: #{tpu_custom_call.1} parent=5 // pred_check
        _
      $region46: #{tpu_custom_call.1} parent=5 // pred_check_branch
        %369 = sbr.rel (%p366) target = $region48
      $region47: #{tpu_custom_call.1} parent=5 // pred_region
        %s370 = ssub.s32 %s16, 1
        %s371 = smul.u32 4, %s26
        %p372 = scmp.lt.s32.totalorder %s371, 3
        %s373 = scalar_select %p372, %s371, 3
        %s374 = smul.addr %s373, 4
        %s375 = scalar_lea.vmem %s1, %s374
        %p376 = pneg %p61
        %p377 = pneg %p58
        %s378 = sld [smem:[#allocation7 + %s27]]
        %s379 = ssub.s32 %s378, 1
        %p380 = scmp.lt.s32.totalorder %s28, %s379
        %s381 = scalar_select %p380, %s28, %s379
        %s382 = smul.u32 16, %s381
        %p383 = scmp.lt.s32.totalorder %s27, 0
        %s384 = scalar_select %p383, %s27, 0
        %p385 = scmp.lt.s32.totalorder %s382, 31
        %s386 = scalar_select %p385, %s382, 31
        %s387 = smul.addr %s384, 32
        %s388 = sadd.s32 %s386, %s387
        %s389 = smul.addr %s388, 4
        %s390 = scalar_lea.vmem %s2, %s389
        %p391 = pneg %p97
        %p392 = pneg %p94
        %p393 = scmp.lt.s32.totalorder %s27, 0
        %s394 = scalar_select %p393, %s27, 0
        %s395 = smul.addr %s394, 4
        %s396 = scalar_lea.vmem %s3, %s395
        %p397 = pneg %p123
        %p398 = pneg %p120
        %p399 = scmp.lt.s32.totalorder %s27, 0
        %s400 = scalar_select %p399, %s27, 0
        %s401 = smul.addr %s400, 2
        %s402 = scalar_lea.vmem %s4, %s401
        %p403 = pneg %p149
        %p404 = pneg %p146
        %p405 = scmp.lt.s32.totalorder %s27, 0
        %s406 = scalar_select %p405, %s27, 0
        %s407 = smul.addr %s406, 4
        %s408 = scalar_lea.vmem %s5, %s407
        %p409 = pneg %p175
        %p410 = pneg %p172
        %p411 = scmp.lt.s32.totalorder %s27, 0
        %s412 = scalar_select %p411, %s27, 0
        %s413 = scalar_lea.vmem %s6, %s412
        %p414 = pneg %p201
        %p415 = pneg %p198
        %s416 = sld [smem:[#allocation7 + %s27]]
        %s417 = ssub.s32 %s416, 1
        %p418 = scmp.lt.s32.totalorder %s28, %s417
        %s419 = scalar_select %p418, %s28, %s417
        %p420 = scmp.lt.s32.totalorder %s27, 0
        %s421 = scalar_select %p420, %s27, 0
        %p422 = scmp.lt.s32.totalorder %s26, 0
        %s423 = scalar_select %p422, %s26, 0
        %p424 = scmp.lt.s32.totalorder %s419, 1
        %s425 = scalar_select %p424, %s419, 1
        %s426 = smul.addr %s423, 2
        %s427 = sadd.s32 %s425, %s426
        %s428 = smul.addr %s421, 2
        %s429 = sadd.s32 %s427, %s428
        %s430 = smul.addr %s429, 8
        %s431 = scalar_lea.vmem %s7, %s430
        %p432 = pneg %p239
        %p433 = pneg %p236
        %p434 = pneg %p265
        %p435 = pneg %p262
        %s436 = smul.u32 4, %s26
        %p437 = scmp.lt.s32.totalorder %s436, 3
        %s438 = scalar_select %p437, %s436, 3
        %s439 = smul.addr %s438, 4
        %s440 = scalar_lea.vmem %s1, %s439
        %s441 = smul.u32 4, %s26
        %s442 = sld [smem:[#allocation7 + %s27]]
        %s443 = ssub.s32 %s442, 1
        %p444 = scmp.lt.s32.totalorder %s28, %s443
        %s445 = scalar_select %p444, %s28, %s443
        %s446 = smul.u32 16, %s445
        %p447 = scmp.lt.s32.totalorder %s27, 0
        %s448 = scalar_select %p447, %s27, 0
        %p449 = scmp.lt.s32.totalorder %s446, 31
        %s450 = scalar_select %p449, %s446, 31
        %s451 = smul.addr %s448, 32
        %s452 = sadd.s32 %s450, %s451
        %s453 = smul.addr %s452, 4
        %s454 = scalar_lea.vmem %s2, %s453
        %s455 = sld [smem:[#allocation7 + %s27]]
        %s456 = ssub.s32 %s455, 1
        %p457 = scmp.lt.s32.totalorder %s28, %s456
        %s458 = scalar_select %p457, %s28, %s456
        %s459 = smul.u32 16, %s458
        %p460 = scmp.lt.s32.totalorder %s27, 0
        %s461 = scalar_select %p460, %s27, 0
        %s462 = smul.addr %s461, 4
        %s463 = scalar_lea.vmem %s3, %s462
        %p464 = scmp.lt.s32.totalorder %s27, 0
        %s465 = scalar_select %p464, %s27, 0
        %s466 = smul.addr %s465, 2
        %s467 = scalar_lea.vmem %s4, %s466
        %p468 = scmp.lt.s32.totalorder %s27, 0
        %s469 = scalar_select %p468, %s27, 0
        %s470 = smul.addr %s469, 4
        %s471 = scalar_lea.vmem %s5, %s470
        %p472 = scmp.lt.s32.totalorder %s27, 0
        %s473 = scalar_select %p472, %s27, 0
        %s474 = scalar_lea.vmem %s6, %s473
        %s475 = sld [smem:[#allocation7 + %s27]]
        %s476 = ssub.s32 %s475, 1
        %p477 = scmp.lt.s32.totalorder %s28, %s476
        %s478 = scalar_select %p477, %s28, %s476
        %p479 = scmp.lt.s32.totalorder %s27, 0
        %s480 = scalar_select %p479, %s27, 0
        %p481 = scmp.lt.s32.totalorder %s26, 0
        %s482 = scalar_select %p481, %s26, 0
        %p483 = scmp.lt.s32.totalorder %s478, 1
        %s484 = scalar_select %p483, %s478, 1
        %s485 = smul.addr %s482, 2
        %s486 = sadd.s32 %s484, %s485
        %s487 = smul.addr %s480, 2
        %s488 = sadd.s32 %s486, %s487
        %s489 = smul.addr %s488, 8
        %s490 = scalar_lea.vmem %s7, %s489
        %s491 = sld [smem:[#allocation7 + %s27]]
        %s492 = ssub.s32 %s491, 1
        %p493 = scmp.lt.s32.totalorder %s28, %s492
        %s494 = scalar_select %p493, %s28, %s492
        %s495 = smul.u32 4, %s26
        %s497 = sld [smem:[#allocation7 + %s27]]
        %p498 = scmp.eq.s32.totalorder %s27, 0
        %p499 = scmp.eq.s32.totalorder %s28, 0
        %p500 = pnand %p498, %p499
        %p501 = pneg %p500
        // Predicated region
        $region49: #{tpu_custom_call.1} parent=47 // pred_check
          _
        $region50: #{tpu_custom_call.1} parent=47 // pred_check_branch
          %503 = sbr.rel (%p500) target = $region52
        $region51: #{tpu_custom_call.1} parent=47 // pred_region
          %vm504 = vcmask 261120
          %505 = vst.msk [vmem:[#allocation8] sm:$0xff] %vm504, 0.0
          %506 = vst.msk [vmem:[#allocation8 + $0x8] sm:$0xff] %vm504, 0.0
          %507 = vst.msk [vmem:[#allocation8 + $0x10] sm:$0xff] %vm504, 0.0
          %508 = vst.msk [vmem:[#allocation8 + $0x18] sm:$0xff] %vm504, 0.0
        $region52: #{tpu_custom_call.1} parent=47 // pred_fallthru
          _
        // Predicated region
        $region53: #{tpu_custom_call.1} parent=47 // pred_check
          %p509 = pneg %p499
        $region54: #{tpu_custom_call.1} parent=47 // pred_check_branch
          %511 = sbr.rel (%p509) target = $region56
        $region55: #{tpu_custom_call.1} parent=47 // pred_region
          %v512 = vld [vmem:[%s471] sm:$0x1]
          %v513 = vld [vmem:[%s471 + $0x1] sm:$0x1]
          %v514 = vld [vmem:[%s471 + $0x2] sm:$0x1]
          %v515 = vld [vmem:[%s471 + $0x3] sm:$0x1]
          %v516 = vld [vmem:[%s440] sm:$0xf]
          %v517 = vld [vmem:[%s440 + $0x4] sm:$0xf]
          %v518 = vld [vmem:[%s440 + $0x8] sm:$0xf]
          %v519 = vld [vmem:[%s440 + $0xc] sm:$0xf]
          %v520 = vunpack.c.l.bf16 %v516
          %v521 = vunpack.c.l.bf16 %v517
          %v522 = vunpack.c.l.bf16 %v518
          %v523 = vunpack.c.l.bf16 %v519
          %v528 = vperm.slane %v512, 0
          %v529 = vperm.slane %v513, 0
          %v530 = vperm.slane %v514, 0
          %v531 = vperm.slane %v515, 0
          %v536 = vmul.f32 %v528, %v520
          %v537 = vmul.f32 %v528, %v521
          %v538 = vmul.f32 %v528, %v522
          %v539 = vmul.f32 %v528, %v523
          %v540 = vmul.f32 %v529, %v520
          %v541 = vmul.f32 %v529, %v521
          %v542 = vmul.f32 %v529, %v522
          %v543 = vmul.f32 %v529, %v523
          %v544 = vmul.f32 %v530, %v520
          %v545 = vmul.f32 %v530, %v521
          %v546 = vmul.f32 %v530, %v522
          %v547 = vmul.f32 %v530, %v523
          %v548 = vmul.f32 %v531, %v520
          %v549 = vmul.f32 %v531, %v521
          %v550 = vmul.f32 %v531, %v522
          %v551 = vmul.f32 %v531, %v523
          %vm552 = vcmask 64512
          %v553 = vsel %vm552, %v536, 0.0
          %554 = vadd.xlane.f32.xlu0 %v553
          %v555 = vpop.xlane.xlu0 %554
          %v556 = vsel %vm552, %v537, 0.0
          %557 = vadd.xlane.f32.xlu0 %v556
          %v558 = vpop.xlane.xlu0 %557
          %v559 = vsel %vm552, %v538, 0.0
          %560 = vadd.xlane.f32.xlu0 %v559
          %v561 = vpop.xlane.xlu0 %560
          %v562 = vsel %vm552, %v539, 0.0
          %563 = vadd.xlane.f32.xlu0 %v562
          %v564 = vpop.xlane.xlu0 %563
          %v565 = vsel %vm552, %v540, 0.0
          %566 = vadd.xlane.f32.xlu0 %v565
          %v567 = vpop.xlane.xlu0 %566
          %v568 = vsel %vm552, %v541, 0.0
          %569 = vadd.xlane.f32.xlu0 %v568
          %v570 = vpop.xlane.xlu0 %569
          %v571 = vsel %vm552, %v542, 0.0
          %572 = vadd.xlane.f32.xlu0 %v571
          %v573 = vpop.xlane.xlu0 %572
          %v574 = vsel %vm552, %v543, 0.0
          %575 = vadd.xlane.f32.xlu0 %v574
          %v576 = vpop.xlane.xlu0 %575
          %v577 = vsel %vm552, %v544, 0.0
          %578 = vadd.xlane.f32.xlu0 %v577
          %v579 = vpop.xlane.xlu0 %578
          %v580 = vsel %vm552, %v545, 0.0
          %581 = vadd.xlane.f32.xlu0 %v580
          %v582 = vpop.xlane.xlu0 %581
          %v583 = vsel %vm552, %v546, 0.0
          %584 = vadd.xlane.f32.xlu0 %v583
          %v585 = vpop.xlane.xlu0 %584
          %v586 = vsel %vm552, %v547, 0.0
          %587 = vadd.xlane.f32.xlu0 %v586
          %v588 = vpop.xlane.xlu0 %587
          %v589 = vsel %vm552, %v548, 0.0
          %590 = vadd.xlane.f32.xlu0 %v589
          %v591 = vpop.xlane.xlu0 %590
          %v592 = vsel %vm552, %v549, 0.0
          %593 = vadd.xlane.f32.xlu0 %v592
          %v594 = vpop.xlane.xlu0 %593
          %v595 = vsel %vm552, %v550, 0.0
          %596 = vadd.xlane.f32.xlu0 %v595
          %v597 = vpop.xlane.xlu0 %596
          %v598 = vsel %vm552, %v551, 0.0
          %599 = vadd.xlane.f32.xlu0 %v598
          %v600 = vpop.xlane.xlu0 %599
          %vm601 = vcmask 7168
          %602 = vst.msk [vmem:[#allocation2] sm:$0xff] %vm601, %v555
          %603 = vst.msk [vmem:[#allocation2 + $0x8] sm:$0xff] %vm601, %v558
          %604 = vst.msk [vmem:[#allocation2 + $0x10] sm:$0xff] %vm601, %v561
          %605 = vst.msk [vmem:[#allocation2 + $0x18] sm:$0xff] %vm601, %v564
          %606 = vst.msk [vmem:[#allocation2 + $0x20] sm:$0xff] %vm601, %v567
          %607 = vst.msk [vmem:[#allocation2 + $0x28] sm:$0xff] %vm601, %v570
          %608 = vst.msk [vmem:[#allocation2 + $0x30] sm:$0xff] %vm601, %v573
          %609 = vst.msk [vmem:[#allocation2 + $0x38] sm:$0xff] %vm601, %v576
          %610 = vst.msk [vmem:[#allocation2 + $0x40] sm:$0xff] %vm601, %v579
          %611 = vst.msk [vmem:[#allocation2 + $0x48] sm:$0xff] %vm601, %v582
          %612 = vst.msk [vmem:[#allocation2 + $0x50] sm:$0xff] %vm601, %v585
          %613 = vst.msk [vmem:[#allocation2 + $0x58] sm:$0xff] %vm601, %v588
          %614 = vst.msk [vmem:[#allocation2 + $0x60] sm:$0xff] %vm601, %v591
          %615 = vst.msk [vmem:[#allocation2 + $0x68] sm:$0xff] %vm601, %v594
          %616 = vst.msk [vmem:[#allocation2 + $0x70] sm:$0xff] %vm601, %v597
          %617 = vst.msk [vmem:[#allocation2 + $0x78] sm:$0xff] %vm601, %v600
          %618 = vst.msk [vmem:[#allocation3] sm:$0xff] %vm601, -1e+30
          %619 = vst.msk [vmem:[#allocation3 + $0x8] sm:$0xff] %vm601, -1e+30
          %620 = vst.msk [vmem:[#allocation3 + $0x10] sm:$0xff] %vm601, -1e+30
          %621 = vst.msk [vmem:[#allocation3 + $0x18] sm:$0xff] %vm601, -1e+30
          %622 = vst.msk [vmem:[#allocation3 + $0x20] sm:$0xff] %vm601, -1e+30
          %623 = vst.msk [vmem:[#allocation3 + $0x28] sm:$0xff] %vm601, -1e+30
          %624 = vst.msk [vmem:[#allocation3 + $0x30] sm:$0xff] %vm601, -1e+30
          %625 = vst.msk [vmem:[#allocation3 + $0x38] sm:$0xff] %vm601, -1e+30
          %626 = vst.msk [vmem:[#allocation3 + $0x40] sm:$0xff] %vm601, -1e+30
          %627 = vst.msk [vmem:[#allocation3 + $0x48] sm:$0xff] %vm601, -1e+30
          %628 = vst.msk [vmem:[#allocation3 + $0x50] sm:$0xff] %vm601, -1e+30
          %629 = vst.msk [vmem:[#allocation3 + $0x58] sm:$0xff] %vm601, -1e+30
          %630 = vst.msk [vmem:[#allocation3 + $0x60] sm:$0xff] %vm601, -1e+30
          %631 = vst.msk [vmem:[#allocation3 + $0x68] sm:$0xff] %vm601, -1e+30
          %632 = vst.msk [vmem:[#allocation3 + $0x70] sm:$0xff] %vm601, -1e+30
          %633 = vst.msk [vmem:[#allocation3 + $0x78] sm:$0xff] %vm601, -1e+30
          %634 = vst.msk [vmem:[#allocation4] sm:$0xff] %vm601, 0.0
          %635 = vst.msk [vmem:[#allocation4 + $0x8] sm:$0xff] %vm601, 0.0
          %636 = vst.msk [vmem:[#allocation4 + $0x10] sm:$0xff] %vm601, 0.0
          %637 = vst.msk [vmem:[#allocation4 + $0x18] sm:$0xff] %vm601, 0.0
          %638 = vst.msk [vmem:[#allocation4 + $0x20] sm:$0xff] %vm601, 0.0
          %639 = vst.msk [vmem:[#allocation4 + $0x28] sm:$0xff] %vm601, 0.0
          %640 = vst.msk [vmem:[#allocation4 + $0x30] sm:$0xff] %vm601, 0.0
          %641 = vst.msk [vmem:[#allocation4 + $0x38] sm:$0xff] %vm601, 0.0
          %642 = vst.msk [vmem:[#allocation4 + $0x40] sm:$0xff] %vm601, 0.0
          %643 = vst.msk [vmem:[#allocation4 + $0x48] sm:$0xff] %vm601, 0.0
          %644 = vst.msk [vmem:[#allocation4 + $0x50] sm:$0xff] %vm601, 0.0
          %645 = vst.msk [vmem:[#allocation4 + $0x58] sm:$0xff] %vm601, 0.0
          %646 = vst.msk [vmem:[#allocation4 + $0x60] sm:$0xff] %vm601, 0.0
          %647 = vst.msk [vmem:[#allocation4 + $0x68] sm:$0xff] %vm601, 0.0
          %648 = vst.msk [vmem:[#allocation4 + $0x70] sm:$0xff] %vm601, 0.0
          %649 = vst.msk [vmem:[#allocation4 + $0x78] sm:$0xff] %vm601, 0.0
          %650 = vst.msk [vmem:[#allocation5] sm:$0xff] %vm552, 0.0
          %651 = vst.msk [vmem:[#allocation5 + $0x8] sm:$0xff] %vm552, 0.0
          %652 = vst.msk [vmem:[#allocation5 + $0x10] sm:$0xff] %vm552, 0.0
          %653 = vst.msk [vmem:[#allocation5 + $0x18] sm:$0xff] %vm552, 0.0
          %654 = vst.msk [vmem:[#allocation5 + $0x20] sm:$0xff] %vm552, 0.0
          %655 = vst.msk [vmem:[#allocation5 + $0x28] sm:$0xff] %vm552, 0.0
          %656 = vst.msk [vmem:[#allocation5 + $0x30] sm:$0xff] %vm552, 0.0
          %657 = vst.msk [vmem:[#allocation5 + $0x38] sm:$0xff] %vm552, 0.0
          %658 = vst.msk [vmem:[#allocation5 + $0x40] sm:$0xff] %vm552, 0.0
          %659 = vst.msk [vmem:[#allocation5 + $0x48] sm:$0xff] %vm552, 0.0
          %660 = vst.msk [vmem:[#allocation5 + $0x50] sm:$0xff] %vm552, 0.0
          %661 = vst.msk [vmem:[#allocation5 + $0x58] sm:$0xff] %vm552, 0.0
          %662 = vst.msk [vmem:[#allocation5 + $0x60] sm:$0xff] %vm552, 0.0
          %663 = vst.msk [vmem:[#allocation5 + $0x68] sm:$0xff] %vm552, 0.0
          %664 = vst.msk [vmem:[#allocation5 + $0x70] sm:$0xff] %vm552, 0.0
          %665 = vst.msk [vmem:[#allocation5 + $0x78] sm:$0xff] %vm552, 0.0
        $region56: #{tpu_custom_call.1} parent=47 // pred_fallthru
          _
        %p666 = scmp.lt.s32.totalorder %s28, %s497
        // Predicated region
        $region57: #{tpu_custom_call.1} parent=47 // pred_check
          %p667 = pneg %p666
        $region58: #{tpu_custom_call.1} parent=47 // pred_check_branch
          %669 = sbr.rel (%p667) target = $region60
        $region59: #{tpu_custom_call.1} parent=47 // pred_region
          %v670 = vld [vmem:[%s454] sm:$0xf]
          %v671 = vld [vmem:[%s454 + $0x4] sm:$0xf]
          %v672 = vld [vmem:[%s454 + $0x8] sm:$0xf]
          %v673 = vld [vmem:[%s454 + $0xc] sm:$0xf]
          %v674 = vld [vmem:[%s454 + $0x10] sm:$0xf]
          %v675 = vld [vmem:[%s454 + $0x14] sm:$0xf]
          %v676 = vld [vmem:[%s454 + $0x18] sm:$0xf]
          %v677 = vld [vmem:[%s454 + $0x1c] sm:$0xf]
          %v678 = vld [vmem:[%s454 + $0x20] sm:$0xf]
          %v679 = vld [vmem:[%s454 + $0x24] sm:$0xf]
          %v680 = vld [vmem:[%s454 + $0x28] sm:$0xf]
          %v681 = vld [vmem:[%s454 + $0x2c] sm:$0xf]
          %v682 = vld [vmem:[%s454 + $0x30] sm:$0xf]
          %v683 = vld [vmem:[%s454 + $0x34] sm:$0xf]
          %v684 = vld [vmem:[%s454 + $0x38] sm:$0xf]
          %v685 = vld [vmem:[%s454 + $0x3c] sm:$0xf]
          %v686 = vld [vmem:[%s463] sm:$0xf]
          %v703 = vunpack.c.l.b16 %v670
          %v704 = vunpack.c.l.b16 %v671
          %v705 = vunpack.c.l.b16 %v672
          %v706 = vunpack.c.l.b16 %v673
          %v707 = vunpack.c.l.b16 %v674
          %v708 = vunpack.c.l.b16 %v675
          %v709 = vunpack.c.l.b16 %v676
          %v710 = vunpack.c.l.b16 %v677
          %v711 = vunpack.c.l.b16 %v678
          %v712 = vunpack.c.l.b16 %v679
          %v713 = vunpack.c.l.b16 %v680
          %v714 = vunpack.c.l.b16 %v681
          %v715 = vunpack.c.l.b16 %v682
          %v716 = vunpack.c.l.b16 %v683
          %v717 = vunpack.c.l.b16 %v684
          %v718 = vunpack.c.l.b16 %v685
          %v719 = vpack.c.b16 %v704, %v703
          %v720 = vpack.c.b16 %v706, %v705
          %v721 = vpack.c.b16 %v708, %v707
          %v722 = vpack.c.b16 %v710, %v709
          %v723 = vpack.c.b16 %v712, %v711
          %v724 = vpack.c.b16 %v714, %v713
          %v725 = vpack.c.b16 %v716, %v715
          %v726 = vpack.c.b16 %v718, %v717
          %vm727 = vcmask 64512
          %v729 = vsel %vm727, %v719, 0
          %v732 = vsel %vm727, %v720, 0
          %v735 = vsel %vm727, %v721, 0
          %v738 = vsel %vm727, %v722, 0
          %v741 = vsel %vm727, %v723, 0
          %v744 = vsel %vm727, %v724, 0
          %v747 = vsel %vm727, %v725, 0
          %v750 = vsel %vm727, %v726, 0
          %vm752 = vcmask 1043456
          %v754 = vsel %vm752, %v686, 0
          %756 = vmatpush.bf16.msra.mxu0 0
          %757 = vmatpush.bf16.msra.mxu0 0
          %758 = vmatpush.bf16.msra.mxu0 0
          %759 = vmatpush.bf16.msra.mxu0 0
          %760 = vmatpush.bf16.msra.mxu0 0
          %761 = vmatpush.bf16.msra.mxu0 0
          %762 = vmatpush.bf16.msra.mxu0 0
          %763 = vmatpush.bf16.msra.mxu0 %v754
          %764 = vmatmul.bf16.gmra.mxu0 %v729
          %v765 = vpop.f32.mrf.mxu0
          %v766 = vadd.f32 0.0, %v765
          %v767 = vpop.f32.mrf.mxu0
          %v768 = vadd.f32 0.0, %v767
          %769 = vmatmul.bf16.gmra.mxu0 %v732
          %v770 = vpop.f32.mrf.mxu0
          %v771 = vadd.f32 0.0, %v770
          %v772 = vpop.f32.mrf.mxu0
          %v773 = vadd.f32 0.0, %v772
          %774 = vmatmul.bf16.gmra.mxu0 %v735
          %v775 = vpop.f32.mrf.mxu0
          %v776 = vadd.f32 0.0, %v775
          %v777 = vpop.f32.mrf.mxu0
          %v778 = vadd.f32 0.0, %v777
          %779 = vmatmul.bf16.gmra.mxu0 %v738
          %v780 = vpop.f32.mrf.mxu0
          %v781 = vadd.f32 0.0, %v780
          %v782 = vpop.f32.mrf.mxu0
          %v783 = vadd.f32 0.0, %v782
          %784 = vmatmul.bf16.gmra.mxu0 %v741
          %v785 = vpop.f32.mrf.mxu0
          %v786 = vadd.f32 0.0, %v785
          %v787 = vpop.f32.mrf.mxu0
          %v788 = vadd.f32 0.0, %v787
          %789 = vmatmul.bf16.gmra.mxu0 %v744
          %v790 = vpop.f32.mrf.mxu0
          %v791 = vadd.f32 0.0, %v790
          %v792 = vpop.f32.mrf.mxu0
          %v793 = vadd.f32 0.0, %v792
          %794 = vmatmul.bf16.gmra.mxu0 %v747
          %v795 = vpop.f32.mrf.mxu0
          %v796 = vadd.f32 0.0, %v795
          %v797 = vpop.f32.mrf.mxu0
          %v798 = vadd.f32 0.0, %v797
          %799 = vmatmul.bf16.gmra.mxu0 %v750
          %v800 = vpop.f32.mrf.mxu0
          %v801 = vadd.f32 0.0, %v800
          %v802 = vpop.f32.mrf.mxu0
          %v803 = vadd.f32 0.0, %v802
          %804 = vdwg.mxu0
          %v805 = vpack.c.bf16 %v766, %v766
          %v806 = vpack.c.bf16 %v768, %v768
          %v807 = vpack.c.bf16 %v771, %v771
          %v808 = vpack.c.bf16 %v773, %v773
          %v809 = vpack.c.bf16 %v776, %v776
          %v810 = vpack.c.bf16 %v778, %v778
          %v811 = vpack.c.bf16 %v781, %v781
          %v812 = vpack.c.bf16 %v783, %v783
          %v813 = vpack.c.bf16 %v786, %v786
          %v814 = vpack.c.bf16 %v788, %v788
          %v815 = vpack.c.bf16 %v791, %v791
          %v816 = vpack.c.bf16 %v793, %v793
          %v817 = vpack.c.bf16 %v796, %v796
          %v818 = vpack.c.bf16 %v798, %v798
          %v819 = vpack.c.bf16 %v801, %v801
          %v820 = vpack.c.bf16 %v803, %v803
          %v821 = vld [vmem:[%s467] sm:$0x3]
          %v823 = vsel %vm727, %v821, 0
          %825 = vmatpush.bf16.xpose.msra.mxu0 %v750
          %826 = vmatpush.bf16.xpose.msra.mxu0 %v747
          %827 = vmatpush.bf16.xpose.msra.mxu0 %v744
          %828 = vmatpush.bf16.xpose.msra.mxu0 %v741
          %829 = vmatpush.bf16.xpose.msra.mxu0 %v738
          %830 = vmatpush.bf16.xpose.msra.mxu0 %v735
          %831 = vmatpush.bf16.xpose.msra.mxu0 %v732
          %832 = vmatpush.bf16.xpose.msra.mxu0 %v729
          %833 = vmatmul.bf16.gmra.mxu0 %v823
          %v834 = vpop.f32.mrf.mxu0
          %v835 = vadd.f32 0.0, %v834
          %v836 = vpop.f32.mrf.mxu0
          %837 = vdwg.mxu0
          %v838 = vld [vmem:[%s490] sm:$0xff]
          %v839 = vunpack.c.0.s8 %v838
          %v840 = vunpack.c.1.s8 %v838
          %v841 = vunpack.c.2.s8 %v838
          %v842 = vunpack.c.3.s8 %v838
          %vm843 = vcmp.gt.s32.totalorder %v839, 0
          %vm844 = vcmp.gt.s32.totalorder %v840, 0
          %vm845 = vcmp.gt.s32.totalorder %v841, 0
          %vm846 = vcmp.gt.s32.totalorder %v842, 0
          %v847 = vld [vmem:[#allocation2] sm:$0xff]
          %v848 = vld [vmem:[#allocation2 + $0x8] sm:$0xff]
          %v849 = vld [vmem:[#allocation2 + $0x10] sm:$0xff]
          %v850 = vld [vmem:[#allocation2 + $0x18] sm:$0xff]
          %v851 = vld [vmem:[#allocation2 + $0x20] sm:$0xff]
          %v852 = vld [vmem:[#allocation2 + $0x28] sm:$0xff]
          %v853 = vld [vmem:[#allocation2 + $0x30] sm:$0xff]
          %v854 = vld [vmem:[#allocation2 + $0x38] sm:$0xff]
          %v855 = vld [vmem:[#allocation2 + $0x40] sm:$0xff]
          %v856 = vld [vmem:[#allocation2 + $0x48] sm:$0xff]
          %v857 = vld [vmem:[#allocation2 + $0x50] sm:$0xff]
          %v858 = vld [vmem:[#allocation2 + $0x58] sm:$0xff]
          %v859 = vld [vmem:[#allocation2 + $0x60] sm:$0xff]
          %v860 = vld [vmem:[#allocation2 + $0x68] sm:$0xff]
          %v861 = vld [vmem:[#allocation2 + $0x70] sm:$0xff]
          %v862 = vld [vmem:[#allocation2 + $0x78] sm:$0xff]
          %v864 = vrot.slane %v835, 1
          %v865 = vrot.slane %v835, 2
          %v866 = vrot.slane %v835, 3
          %868 = vset.pattern.permute.xlu0 0
          %869 = vperm.xlu0 %868, %v847
          %v870 = vpop.permute.xlu0 %869
          %873 = vset.pattern.permute.xlu0 0
          %874 = vperm.xlu0 %873, %v848
          %v875 = vpop.permute.xlu0 %874
          %878 = vset.pattern.permute.xlu0 0
          %879 = vperm.xlu0 %878, %v849
          %v880 = vpop.permute.xlu0 %879
          %883 = vset.pattern.permute.xlu0 0
          %884 = vperm.xlu0 %883, %v850
          %v885 = vpop.permute.xlu0 %884
          %888 = vset.pattern.permute.xlu0 0
          %889 = vperm.xlu0 %888, %v851
          %v890 = vpop.permute.xlu0 %889
          %893 = vset.pattern.permute.xlu0 0
          %894 = vperm.xlu0 %893, %v852
          %v895 = vpop.permute.xlu0 %894
          %898 = vset.pattern.permute.xlu0 0
          %899 = vperm.xlu0 %898, %v853
          %v900 = vpop.permute.xlu0 %899
          %903 = vset.pattern.permute.xlu0 0
          %904 = vperm.xlu0 %903, %v854
          %v905 = vpop.permute.xlu0 %904
          %908 = vset.pattern.permute.xlu0 0
          %909 = vperm.xlu0 %908, %v855
          %v910 = vpop.permute.xlu0 %909
          %913 = vset.pattern.permute.xlu0 0
          %914 = vperm.xlu0 %913, %v856
          %v915 = vpop.permute.xlu0 %914
          %918 = vset.pattern.permute.xlu0 0
          %919 = vperm.xlu0 %918, %v857
          %v920 = vpop.permute.xlu0 %919
          %923 = vset.pattern.permute.xlu0 0
          %924 = vperm.xlu0 %923, %v858
          %v925 = vpop.permute.xlu0 %924
          %928 = vset.pattern.permute.xlu0 0
          %929 = vperm.xlu0 %928, %v859
          %v930 = vpop.permute.xlu0 %929
          %933 = vset.pattern.permute.xlu0 0
          %934 = vperm.xlu0 %933, %v860
          %v935 = vpop.permute.xlu0 %934
          %938 = vset.pattern.permute.xlu0 0
          %939 = vperm.xlu0 %938, %v861
          %v940 = vpop.permute.xlu0 %939
          %943 = vset.pattern.permute.xlu0 0
          %944 = vperm.xlu0 %943, %v862
          %v945 = vpop.permute.xlu0 %944
          %v947 = vperm.slane %v835, 0
          %v948 = vperm.slane %v864, 0
          %v949 = vperm.slane %v865, 0
          %v950 = vperm.slane %v866, 0
          %v955 = vadd.f32 %v870, %v947
          %v956 = vadd.f32 %v875, %v947
          %v957 = vadd.f32 %v880, %v947
          %v958 = vadd.f32 %v885, %v947
          %v959 = vadd.f32 %v890, %v948
          %v960 = vadd.f32 %v895, %v948
          %v961 = vadd.f32 %v900, %v948
          %v962 = vadd.f32 %v905, %v948
          %v963 = vadd.f32 %v910, %v949
          %v964 = vadd.f32 %v915, %v949
          %v965 = vadd.f32 %v920, %v949
          %v966 = vadd.f32 %v925, %v949
          %v967 = vadd.f32 %v930, %v950
          %v968 = vadd.f32 %v935, %v950
          %v969 = vadd.f32 %v940, %v950
          %v970 = vadd.f32 %v945, %v950
          %v971 = vmul.f32 %v955, 0.2
          %v972 = vmul.f32 %v956, 0.2
          %v973 = vmul.f32 %v957, 0.2
          %v974 = vmul.f32 %v958, 0.2
          %v975 = vmul.f32 %v959, 0.2
          %v976 = vmul.f32 %v960, 0.2
          %v977 = vmul.f32 %v961, 0.2
          %v978 = vmul.f32 %v962, 0.2
          %v979 = vmul.f32 %v963, 0.2
          %v980 = vmul.f32 %v964, 0.2
          %v981 = vmul.f32 %v965, 0.2
          %v982 = vmul.f32 %v966, 0.2
          %v983 = vmul.f32 %v967, 0.2
          %v984 = vmul.f32 %v968, 0.2
          %v985 = vmul.f32 %v969, 0.2
          %v986 = vmul.f32 %v970, 0.2
          %v987 = vmax.f32 %v955, %v971
          %v988 = vmax.f32 %v956, %v972
          %v989 = vmax.f32 %v957, %v973
          %v990 = vmax.f32 %v958, %v974
          %v991 = vmax.f32 %v959, %v975
          %v992 = vmax.f32 %v960, %v976
          %v993 = vmax.f32 %v961, %v977
          %v994 = vmax.f32 %v962, %v978
          %v995 = vmax.f32 %v963, %v979
          %v996 = vmax.f32 %v964, %v980
          %v997 = vmax.f32 %v965, %v981
          %v998 = vmax.f32 %v966, %v982
          %v999 = vmax.f32 %v967, %v983
          %v1000 = vmax.f32 %v968, %v984
          %v1001 = vmax.f32 %v969, %v985
          %v1002 = vmax.f32 %v970, %v986
          %v1003 = vsel %vm843, 1, 0
          %v1004 = vsel %vm844, 1, 0
          %v1005 = vsel %vm845, 1, 0
          %v1006 = vsel %vm846, 1, 0
          %vm1007 = vcmp.eq.s32.totalorder %v1003, 1
          %vm1008 = vcmp.eq.s32.totalorder %v1004, 1
          %vm1009 = vcmp.eq.s32.totalorder %v1005, 1
          %vm1010 = vcmp.eq.s32.totalorder %v1006, 1
          %v1011 = vsel %vm1007, %v987, -1e+30
          %v1012 = vsel %vm1008, %v988, -1e+30
          %v1013 = vsel %vm1009, %v989, -1e+30
          %v1014 = vsel %vm1010, %v990, -1e+30
          %v1015 = vsel %vm1007, %v991, -1e+30
          %v1016 = vsel %vm1008, %v992, -1e+30
          %v1017 = vsel %vm1009, %v993, -1e+30
          %v1018 = vsel %vm1010, %v994, -1e+30
          %v1019 = vsel %vm1007, %v995, -1e+30
          %v1020 = vsel %vm1008, %v996, -1e+30
          %v1021 = vsel %vm1009, %v997, -1e+30
          %v1022 = vsel %vm1010, %v998, -1e+30
          %v1023 = vsel %vm1007, %v999, -1e+30
          %v1024 = vsel %vm1008, %v1000, -1e+30
          %v1025 = vsel %vm1009, %v1001, -1e+30
          %v1026 = vsel %vm1010, %v1002, -1e+30
          %v1027 = vld [vmem:[#allocation3] sm:$0xff]
          %v1028 = vld [vmem:[#allocation3 + $0x8] sm:$0xff]
          %v1029 = vld [vmem:[#allocation3 + $0x10] sm:$0xff]
          %v1030 = vld [vmem:[#allocation3 + $0x18] sm:$0xff]
          %v1031 = vld [vmem:[#allocation3 + $0x20] sm:$0xff]
          %v1032 = vld [vmem:[#allocation3 + $0x28] sm:$0xff]
          %v1033 = vld [vmem:[#allocation3 + $0x30] sm:$0xff]
          %v1034 = vld [vmem:[#allocation3 + $0x38] sm:$0xff]
          %v1035 = vld [vmem:[#allocation3 + $0x40] sm:$0xff]
          %v1036 = vld [vmem:[#allocation3 + $0x48] sm:$0xff]
          %v1037 = vld [vmem:[#allocation3 + $0x50] sm:$0xff]
          %v1038 = vld [vmem:[#allocation3 + $0x58] sm:$0xff]
          %v1039 = vld [vmem:[#allocation3 + $0x60] sm:$0xff]
          %v1040 = vld [vmem:[#allocation3 + $0x68] sm:$0xff]
          %v1041 = vld [vmem:[#allocation3 + $0x70] sm:$0xff]
          %v1042 = vld [vmem:[#allocation3 + $0x78] sm:$0xff]
          %1043 = vmax.xlane.f32.xlu0 %v1011
          %v1044 = vpop.xlane.xlu0 %1043
          %1045 = vmax.xlane.f32.xlu0 %v1012
          %v1046 = vpop.xlane.xlu0 %1045
          %1047 = vmax.xlane.f32.xlu0 %v1013
          %v1048 = vpop.xlane.xlu0 %1047
          %1049 = vmax.xlane.f32.xlu0 %v1014
          %v1050 = vpop.xlane.xlu0 %1049
          %1051 = vmax.xlane.f32.xlu0 %v1015
          %v1052 = vpop.xlane.xlu0 %1051
          %1053 = vmax.xlane.f32.xlu0 %v1016
          %v1054 = vpop.xlane.xlu0 %1053
          %1055 = vmax.xlane.f32.xlu0 %v1017
          %v1056 = vpop.xlane.xlu0 %1055
          %1057 = vmax.xlane.f32.xlu0 %v1018
          %v1058 = vpop.xlane.xlu0 %1057
          %1059 = vmax.xlane.f32.xlu0 %v1019
          %v1060 = vpop.xlane.xlu0 %1059
          %1061 = vmax.xlane.f32.xlu0 %v1020
          %v1062 = vpop.xlane.xlu0 %1061
          %1063 = vmax.xlane.f32.xlu0 %v1021
          %v1064 = vpop.xlane.xlu0 %1063
          %1065 = vmax.xlane.f32.xlu0 %v1022
          %v1066 = vpop.xlane.xlu0 %1065
          %1067 = vmax.xlane.f32.xlu0 %v1023
          %v1068 = vpop.xlane.xlu0 %1067
          %1069 = vmax.xlane.f32.xlu0 %v1024
          %v1070 = vpop.xlane.xlu0 %1069
          %1071 = vmax.xlane.f32.xlu0 %v1025
          %v1072 = vpop.xlane.xlu0 %1071
          %1073 = vmax.xlane.f32.xlu0 %v1026
          %v1074 = vpop.xlane.xlu0 %1073
          %v1075 = vmax.f32 %v1027, %v1044
          %v1076 = vmax.f32 %v1028, %v1046
          %v1077 = vmax.f32 %v1029, %v1048
          %v1078 = vmax.f32 %v1030, %v1050
          %v1079 = vmax.f32 %v1031, %v1052
          %v1080 = vmax.f32 %v1032, %v1054
          %v1081 = vmax.f32 %v1033, %v1056
          %v1082 = vmax.f32 %v1034, %v1058
          %v1083 = vmax.f32 %v1035, %v1060
          %v1084 = vmax.f32 %v1036, %v1062
          %v1085 = vmax.f32 %v1037, %v1064
          %v1086 = vmax.f32 %v1038, %v1066
          %v1087 = vmax.f32 %v1039, %v1068
          %v1088 = vmax.f32 %v1040, %v1070
          %v1089 = vmax.f32 %v1041, %v1072
          %v1090 = vmax.f32 %v1042, %v1074
          %1092 = vset.pattern.permute.xlu0 0
          %1093 = vperm.xlu0 %1092, %v1075
          %v1094 = vpop.permute.xlu0 %1093
          %1097 = vset.pattern.permute.xlu0 0
          %1098 = vperm.xlu0 %1097, %v1076
          %v1099 = vpop.permute.xlu0 %1098
          %1102 = vset.pattern.permute.xlu0 0
          %1103 = vperm.xlu0 %1102, %v1077
          %v1104 = vpop.permute.xlu0 %1103
          %1107 = vset.pattern.permute.xlu0 0
          %1108 = vperm.xlu0 %1107, %v1078
          %v1109 = vpop.permute.xlu0 %1108
          %1112 = vset.pattern.permute.xlu0 0
          %1113 = vperm.xlu0 %1112, %v1079
          %v1114 = vpop.permute.xlu0 %1113
          %1117 = vset.pattern.permute.xlu0 0
          %1118 = vperm.xlu0 %1117, %v1080
          %v1119 = vpop.permute.xlu0 %1118
          %1122 = vset.pattern.permute.xlu0 0
          %1123 = vperm.xlu0 %1122, %v1081
          %v1124 = vpop.permute.xlu0 %1123
          %1127 = vset.pattern.permute.xlu0 0
          %1128 = vperm.xlu0 %1127, %v1082
          %v1129 = vpop.permute.xlu0 %1128
          %1132 = vset.pattern.permute.xlu0 0
          %1133 = vperm.xlu0 %1132, %v1083
          %v1134 = vpop.permute.xlu0 %1133
          %1137 = vset.pattern.permute.xlu0 0
          %1138 = vperm.xlu0 %1137, %v1084
          %v1139 = vpop.permute.xlu0 %1138
          %1142 = vset.pattern.permute.xlu0 0
          %1143 = vperm.xlu0 %1142, %v1085
          %v1144 = vpop.permute.xlu0 %1143
          %1147 = vset.pattern.permute.xlu0 0
          %1148 = vperm.xlu0 %1147, %v1086
          %v1149 = vpop.permute.xlu0 %1148
          %1152 = vset.pattern.permute.xlu0 0
          %1153 = vperm.xlu0 %1152, %v1087
          %v1154 = vpop.permute.xlu0 %1153
          %1157 = vset.pattern.permute.xlu0 0
          %1158 = vperm.xlu0 %1157, %v1088
          %v1159 = vpop.permute.xlu0 %1158
          %1162 = vset.pattern.permute.xlu0 0
          %1163 = vperm.xlu0 %1162, %v1089
          %v1164 = vpop.permute.xlu0 %1163
          %1167 = vset.pattern.permute.xlu0 0
          %1168 = vperm.xlu0 %1167, %v1090
          %v1169 = vpop.permute.xlu0 %1168
          %v1171 = vsub.f32 %v1011, %v1094
          %v1172 = vsub.f32 %v1012, %v1099
          %v1173 = vsub.f32 %v1013, %v1104
          %v1174 = vsub.f32 %v1014, %v1109
          %v1175 = vsub.f32 %v1015, %v1114
          %v1176 = vsub.f32 %v1016, %v1119
          %v1177 = vsub.f32 %v1017, %v1124
          %v1178 = vsub.f32 %v1018, %v1129
          %v1179 = vsub.f32 %v1019, %v1134
          %v1180 = vsub.f32 %v1020, %v1139
          %v1181 = vsub.f32 %v1021, %v1144
          %v1182 = vsub.f32 %v1022, %v1149
          %v1183 = vsub.f32 %v1023, %v1154
          %v1184 = vsub.f32 %v1024, %v1159
          %v1185 = vsub.f32 %v1025, %v1164
          %v1186 = vsub.f32 %v1026, %v1169
          %v1187 = vmul.f32 %v1171, 1.442695
          %v1188 = vpow.pop %v1187
          %v1189 = vmul.f32 %v1172, 1.442695
          %v1190 = vpow.pop %v1189
          %v1191 = vmul.f32 %v1173, 1.442695
          %v1192 = vpow.pop %v1191
          %v1193 = vmul.f32 %v1174, 1.442695
          %v1194 = vpow.pop %v1193
          %v1195 = vmul.f32 %v1175, 1.442695
          %v1196 = vpow.pop %v1195
          %v1197 = vmul.f32 %v1176, 1.442695
          %v1198 = vpow.pop %v1197
          %v1199 = vmul.f32 %v1177, 1.442695
          %v1200 = vpow.pop %v1199
          %v1201 = vmul.f32 %v1178, 1.442695
          %v1202 = vpow.pop %v1201
          %v1203 = vmul.f32 %v1179, 1.442695
          %v1204 = vpow.pop %v1203
          %v1205 = vmul.f32 %v1180, 1.442695
          %v1206 = vpow.pop %v1205
          %v1207 = vmul.f32 %v1181, 1.442695
          %v1208 = vpow.pop %v1207
          %v1209 = vmul.f32 %v1182, 1.442695
          %v1210 = vpow.pop %v1209
          %v1211 = vmul.f32 %v1183, 1.442695
          %v1212 = vpow.pop %v1211
          %v1213 = vmul.f32 %v1184, 1.442695
          %v1214 = vpow.pop %v1213
          %v1215 = vmul.f32 %v1185, 1.442695
          %v1216 = vpow.pop %v1215
          %v1217 = vmul.f32 %v1186, 1.442695
          %v1218 = vpow.pop %v1217
          %v1219 = vsub.f32 %v1027, %v1075
          %v1220 = vsub.f32 %v1028, %v1076
          %v1221 = vsub.f32 %v1029, %v1077
          %v1222 = vsub.f32 %v1030, %v1078
          %v1223 = vsub.f32 %v1031, %v1079
          %v1224 = vsub.f32 %v1032, %v1080
          %v1225 = vsub.f32 %v1033, %v1081
          %v1226 = vsub.f32 %v1034, %v1082
          %v1227 = vsub.f32 %v1035, %v1083
          %v1228 = vsub.f32 %v1036, %v1084
          %v1229 = vsub.f32 %v1037, %v1085
          %v1230 = vsub.f32 %v1038, %v1086
          %v1231 = vsub.f32 %v1039, %v1087
          %v1232 = vsub.f32 %v1040, %v1088
          %v1233 = vsub.f32 %v1041, %v1089
          %v1234 = vsub.f32 %v1042, %v1090
          %v1235 = vmul.f32 %v1219, 1.442695
          %v1236 = vpow.pop %v1235
          %v1237 = vmul.f32 %v1220, 1.442695
          %v1238 = vpow.pop %v1237
          %v1239 = vmul.f32 %v1221, 1.442695
          %v1240 = vpow.pop %v1239
          %v1241 = vmul.f32 %v1222, 1.442695
          %v1242 = vpow.pop %v1241
          %v1243 = vmul.f32 %v1223, 1.442695
          %v1244 = vpow.pop %v1243
          %v1245 = vmul.f32 %v1224, 1.442695
          %v1246 = vpow.pop %v1245
          %v1247 = vmul.f32 %v1225, 1.442695
          %v1248 = vpow.pop %v1247
          %v1249 = vmul.f32 %v1226, 1.442695
          %v1250 = vpow.pop %v1249
          %v1251 = vmul.f32 %v1227, 1.442695
          %v1252 = vpow.pop %v1251
          %v1253 = vmul.f32 %v1228, 1.442695
          %v1254 = vpow.pop %v1253
          %v1255 = vmul.f32 %v1229, 1.442695
          %v1256 = vpow.pop %v1255
          %v1257 = vmul.f32 %v1230, 1.442695
          %v1258 = vpow.pop %v1257
          %v1259 = vmul.f32 %v1231, 1.442695
          %v1260 = vpow.pop %v1259
          %v1261 = vmul.f32 %v1232, 1.442695
          %v1262 = vpow.pop %v1261
          %v1263 = vmul.f32 %v1233, 1.442695
          %v1264 = vpow.pop %v1263
          %v1265 = vmul.f32 %v1234, 1.442695
          %v1266 = vpow.pop %v1265
          %v1267 = vld [vmem:[#allocation4] sm:$0xff]
          %v1268 = vld [vmem:[#allocation4 + $0x8] sm:$0xff]
          %v1269 = vld [vmem:[#allocation4 + $0x10] sm:$0xff]
          %v1270 = vld [vmem:[#allocation4 + $0x18] sm:$0xff]
          %v1271 = vld [vmem:[#allocation4 + $0x20] sm:$0xff]
          %v1272 = vld [vmem:[#allocation4 + $0x28] sm:$0xff]
          %v1273 = vld [vmem:[#allocation4 + $0x30] sm:$0xff]
          %v1274 = vld [vmem:[#allocation4 + $0x38] sm:$0xff]
          %v1275 = vld [vmem:[#allocation4 + $0x40] sm:$0xff]
          %v1276 = vld [vmem:[#allocation4 + $0x48] sm:$0xff]
          %v1277 = vld [vmem:[#allocation4 + $0x50] sm:$0xff]
          %v1278 = vld [vmem:[#allocation4 + $0x58] sm:$0xff]
          %v1279 = vld [vmem:[#allocation4 + $0x60] sm:$0xff]
          %v1280 = vld [vmem:[#allocation4 + $0x68] sm:$0xff]
          %v1281 = vld [vmem:[#allocation4 + $0x70] sm:$0xff]
          %v1282 = vld [vmem:[#allocation4 + $0x78] sm:$0xff]
          %v1283 = vmul.f32 %v1236, %v1267
          %v1284 = vmul.f32 %v1238, %v1268
          %v1285 = vmul.f32 %v1240, %v1269
          %v1286 = vmul.f32 %v1242, %v1270
          %v1287 = vmul.f32 %v1244, %v1271
          %v1288 = vmul.f32 %v1246, %v1272
          %v1289 = vmul.f32 %v1248, %v1273
          %v1290 = vmul.f32 %v1250, %v1274
          %v1291 = vmul.f32 %v1252, %v1275
          %v1292 = vmul.f32 %v1254, %v1276
          %v1293 = vmul.f32 %v1256, %v1277
          %v1294 = vmul.f32 %v1258, %v1278
          %v1295 = vmul.f32 %v1260, %v1279
          %v1296 = vmul.f32 %v1262, %v1280
          %v1297 = vmul.f32 %v1264, %v1281
          %v1298 = vmul.f32 %v1266, %v1282
          %1299 = vadd.xlane.f32.xlu0 %v1188
          %v1300 = vpop.xlane.xlu0 %1299
          %1301 = vadd.xlane.f32.xlu0 %v1190
          %v1302 = vpop.xlane.xlu0 %1301
          %1303 = vadd.xlane.f32.xlu0 %v1192
          %v1304 = vpop.xlane.xlu0 %1303
          %1305 = vadd.xlane.f32.xlu0 %v1194
          %v1306 = vpop.xlane.xlu0 %1305
          %1307 = vadd.xlane.f32.xlu0 %v1196
          %v1308 = vpop.xlane.xlu0 %1307
          %1309 = vadd.xlane.f32.xlu0 %v1198
          %v1310 = vpop.xlane.xlu0 %1309
          %1311 = vadd.xlane.f32.xlu0 %v1200
          %v1312 = vpop.xlane.xlu0 %1311
          %1313 = vadd.xlane.f32.xlu0 %v1202
          %v1314 = vpop.xlane.xlu0 %1313
          %1315 = vadd.xlane.f32.xlu0 %v1204
          %v1316 = vpop.xlane.xlu0 %1315
          %1317 = vadd.xlane.f32.xlu0 %v1206
          %v1318 = vpop.xlane.xlu0 %1317
          %1319 = vadd.xlane.f32.xlu0 %v1208
          %v1320 = vpop.xlane.xlu0 %1319
          %1321 = vadd.xlane.f32.xlu0 %v1210
          %v1322 = vpop.xlane.xlu0 %1321
          %1323 = vadd.xlane.f32.xlu0 %v1212
          %v1324 = vpop.xlane.xlu0 %1323
          %1325 = vadd.xlane.f32.xlu0 %v1214
          %v1326 = vpop.xlane.xlu0 %1325
          %1327 = vadd.xlane.f32.xlu0 %v1216
          %v1328 = vpop.xlane.xlu0 %1327
          %1329 = vadd.xlane.f32.xlu0 %v1218
          %v1330 = vpop.xlane.xlu0 %1329
          %v1331 = vadd.f32 %v1283, %v1300
          %v1332 = vadd.f32 %v1284, %v1302
          %v1333 = vadd.f32 %v1285, %v1304
          %v1334 = vadd.f32 %v1286, %v1306
          %v1335 = vadd.f32 %v1287, %v1308
          %v1336 = vadd.f32 %v1288, %v1310
          %v1337 = vadd.f32 %v1289, %v1312
          %v1338 = vadd.f32 %v1290, %v1314
          %v1339 = vadd.f32 %v1291, %v1316
          %v1340 = vadd.f32 %v1292, %v1318
          %v1341 = vadd.f32 %v1293, %v1320
          %v1342 = vadd.f32 %v1294, %v1322
          %v1343 = vadd.f32 %v1295, %v1324
          %v1344 = vadd.f32 %v1296, %v1326
          %v1345 = vadd.f32 %v1297, %v1328
          %v1346 = vadd.f32 %v1298, %v1330
          %vm1347 = vcmask 7168
          %1348 = vst.msk [vmem:[#allocation4] sm:$0xff] %vm1347, %v1331
          %1349 = vst.msk [vmem:[#allocation4 + $0x8] sm:$0xff] %vm1347, %v1332
          %1350 = vst.msk [vmem:[#allocation4 + $0x10] sm:$0xff] %vm1347, %v1333
          %1351 = vst.msk [vmem:[#allocation4 + $0x18] sm:$0xff] %vm1347, %v1334
          %1352 = vst.msk [vmem:[#allocation4 + $0x20] sm:$0xff] %vm1347, %v1335
          %1353 = vst.msk [vmem:[#allocation4 + $0x28] sm:$0xff] %vm1347, %v1336
          %1354 = vst.msk [vmem:[#allocation4 + $0x30] sm:$0xff] %vm1347, %v1337
          %1355 = vst.msk [vmem:[#allocation4 + $0x38] sm:$0xff] %vm1347, %v1338
          %1356 = vst.msk [vmem:[#allocation4 + $0x40] sm:$0xff] %vm1347, %v1339
          %1357 = vst.msk [vmem:[#allocation4 + $0x48] sm:$0xff] %vm1347, %v1340
          %1358 = vst.msk [vmem:[#allocation4 + $0x50] sm:$0xff] %vm1347, %v1341
          %1359 = vst.msk [vmem:[#allocation4 + $0x58] sm:$0xff] %vm1347, %v1342
          %1360 = vst.msk [vmem:[#allocation4 + $0x60] sm:$0xff] %vm1347, %v1343
          %1361 = vst.msk [vmem:[#allocation4 + $0x68] sm:$0xff] %vm1347, %v1344
          %1362 = vst.msk [vmem:[#allocation4 + $0x70] sm:$0xff] %vm1347, %v1345
          %1363 = vst.msk [vmem:[#allocation4 + $0x78] sm:$0xff] %vm1347, %v1346
          %v1364 = vpack.c.bf16 %v1188, %v1188
          %v1365 = vpack.c.bf16 %v1190, %v1190
          %v1366 = vpack.c.bf16 %v1192, %v1192
          %v1367 = vpack.c.bf16 %v1194, %v1194
          %v1368 = vpack.c.bf16 %v1196, %v1196
          %v1369 = vpack.c.bf16 %v1198, %v1198
          %v1370 = vpack.c.bf16 %v1200, %v1200
          %v1371 = vpack.c.bf16 %v1202, %v1202
          %v1372 = vpack.c.bf16 %v1204, %v1204
          %v1373 = vpack.c.bf16 %v1206, %v1206
          %v1374 = vpack.c.bf16 %v1208, %v1208
          %v1375 = vpack.c.bf16 %v1210, %v1210
          %v1376 = vpack.c.bf16 %v1212, %v1212
          %v1377 = vpack.c.bf16 %v1214, %v1214
          %v1378 = vpack.c.bf16 %v1216, %v1216
          %v1379 = vpack.c.bf16 %v1218, %v1218
          %v1380 = vld [vmem:[#allocation5] sm:$0xff]
          %v1381 = vld [vmem:[#allocation5 + $0x8] sm:$0xff]
          %v1382 = vld [vmem:[#allocation5 + $0x10] sm:$0xff]
          %v1383 = vld [vmem:[#allocation5 + $0x18] sm:$0xff]
          %1385 = vset.pattern.permute.xlu0 0
          %1386 = vperm.xlu0 %1385, %v1236
          %v1387 = vpop.permute.xlu0 %1386
          %1390 = vset.pattern.permute.xlu0 0
          %1391 = vperm.xlu0 %1390, %v1238
          %v1392 = vpop.permute.xlu0 %1391
          %1395 = vset.pattern.permute.xlu0 0
          %1396 = vperm.xlu0 %1395, %v1240
          %v1397 = vpop.permute.xlu0 %1396
          %1400 = vset.pattern.permute.xlu0 0
          %1401 = vperm.xlu0 %1400, %v1242
          %v1402 = vpop.permute.xlu0 %1401
          %v1404 = vmul.f32 %v1387, %v1380
          %v1405 = vmul.f32 %v1392, %v1381
          %v1406 = vmul.f32 %v1397, %v1382
          %v1407 = vmul.f32 %v1402, %v1383
          %v1412 = vunpack.c.l.b16 %v1364
          %v1413 = vunpack.c.l.b16 %v1365
          %v1414 = vunpack.c.l.b16 %v1366
          %v1415 = vunpack.c.l.b16 %v1367
          %v1416 = vpack.c.b16 %v1413, %v1412
          %v1417 = vpack.c.b16 %v1415, %v1414
          %v1436 = vunpack.c.l.b16 %v805
          %v1437 = vunpack.c.l.b16 %v806
          %v1438 = vunpack.c.l.b16 %v807
          %v1439 = vunpack.c.l.b16 %v808
          %v1440 = vunpack.c.l.b16 %v809
          %v1441 = vunpack.c.l.b16 %v810
          %v1442 = vunpack.c.l.b16 %v811
          %v1443 = vunpack.c.l.b16 %v812
          %v1444 = vunpack.c.l.b16 %v813
          %v1445 = vunpack.c.l.b16 %v814
          %v1446 = vunpack.c.l.b16 %v815
          %v1447 = vunpack.c.l.b16 %v816
          %v1448 = vunpack.c.l.b16 %v817
          %v1449 = vunpack.c.l.b16 %v818
          %v1450 = vunpack.c.l.b16 %v819
          %v1451 = vunpack.c.l.b16 %v820
          %v1452 = vpack.c.b16 %v1437, %v1436
          %v1453 = vpack.c.b16 %v1439, %v1438
          %v1454 = vpack.c.b16 %v1441, %v1440
          %v1455 = vpack.c.b16 %v1443, %v1442
          %v1456 = vpack.c.b16 %v1445, %v1444
          %v1457 = vpack.c.b16 %v1447, %v1446
          %v1458 = vpack.c.b16 %v1449, %v1448
          %v1459 = vpack.c.b16 %v1451, %v1450
          %1468 = vmatpush.bf16.msra.mxu0 %v1459
          %1469 = vmatpush.bf16.msra.mxu0 %v1458
          %1470 = vmatpush.bf16.msra.mxu0 %v1457
          %1471 = vmatpush.bf16.msra.mxu0 %v1456
          %1472 = vmatpush.bf16.msra.mxu0 %v1455
          %1473 = vmatpush.bf16.msra.mxu0 %v1454
          %1474 = vmatpush.bf16.msra.mxu0 %v1453
          %1475 = vmatpush.bf16.msra.mxu0 %v1452
          %1476 = vmatmul.bf16.gmra.mxu0 %v1416
          %v1477 = vpop.f32.mrf.mxu0
          %v1478 = vadd.f32 0.0, %v1477
          %v1479 = vpop.f32.mrf.mxu0
          %v1480 = vadd.f32 0.0, %v1479
          %1481 = vmatmul.bf16.gmra.mxu0 %v1417
          %v1482 = vpop.f32.mrf.mxu0
          %v1483 = vadd.f32 0.0, %v1482
          %v1484 = vpop.f32.mrf.mxu0
          %v1485 = vadd.f32 0.0, %v1484
          %1486 = vdwg.mxu0
          %v1487 = vadd.f32 %v1404, %v1478
          %v1488 = vadd.f32 %v1405, %v1480
          %v1489 = vadd.f32 %v1406, %v1483
          %v1490 = vadd.f32 %v1407, %v1485
          %1491 = vst.msk [vmem:[#allocation5] sm:$0xff] %vm727, %v1487
          %1492 = vst.msk [vmem:[#allocation5 + $0x8] sm:$0xff] %vm727, %v1488
          %1493 = vst.msk [vmem:[#allocation5 + $0x10] sm:$0xff] %vm727, %v1489
          %1494 = vst.msk [vmem:[#allocation5 + $0x18] sm:$0xff] %vm727, %v1490
          %s1495 = scalar_lea.vmem [#allocation5], 32
          %v1496 = vld [vmem:[%s1495] sm:$0xff]
          %v1497 = vld [vmem:[%s1495 + $0x8] sm:$0xff]
          %v1498 = vld [vmem:[%s1495 + $0x10] sm:$0xff]
          %v1499 = vld [vmem:[%s1495 + $0x18] sm:$0xff]
          %1501 = vset.pattern.permute.xlu0 0
          %1502 = vperm.xlu0 %1501, %v1244
          %v1503 = vpop.permute.xlu0 %1502
          %1506 = vset.pattern.permute.xlu0 0
          %1507 = vperm.xlu0 %1506, %v1246
          %v1508 = vpop.permute.xlu0 %1507
          %1511 = vset.pattern.permute.xlu0 0
          %1512 = vperm.xlu0 %1511, %v1248
          %v1513 = vpop.permute.xlu0 %1512
          %1516 = vset.pattern.permute.xlu0 0
          %1517 = vperm.xlu0 %1516, %v1250
          %v1518 = vpop.permute.xlu0 %1517
          %v1520 = vmul.f32 %v1503, %v1496
          %v1521 = vmul.f32 %v1508, %v1497
          %v1522 = vmul.f32 %v1513, %v1498
          %v1523 = vmul.f32 %v1518, %v1499
          %v1528 = vunpack.c.l.b16 %v1368
          %v1529 = vunpack.c.l.b16 %v1369
          %v1530 = vunpack.c.l.b16 %v1370
          %v1531 = vunpack.c.l.b16 %v1371
          %v1532 = vpack.c.b16 %v1529, %v1528
          %v1533 = vpack.c.b16 %v1531, %v1530
          %1536 = vrot.lane.b32.xlu0 %v1452, 120
          %v1537 = vpop.permute.xlu0 %1536
          %1538 = vrot.lane.b32.xlu0 %v1453, 120
          %v1539 = vpop.permute.xlu0 %1538
          %1540 = vrot.lane.b32.xlu0 %v1454, 120
          %v1541 = vpop.permute.xlu0 %1540
          %1542 = vrot.lane.b32.xlu0 %v1455, 120
          %v1543 = vpop.permute.xlu0 %1542
          %1544 = vrot.lane.b32.xlu0 %v1456, 120
          %v1545 = vpop.permute.xlu0 %1544
          %1546 = vrot.lane.b32.xlu0 %v1457, 120
          %v1547 = vpop.permute.xlu0 %1546
          %1548 = vrot.lane.b32.xlu0 %v1458, 120
          %v1549 = vpop.permute.xlu0 %1548
          %1550 = vrot.lane.b32.xlu0 %v1459, 120
          %v1551 = vpop.permute.xlu0 %1550
          %1560 = vmatpush.bf16.msra.mxu0 %v1551
          %1561 = vmatpush.bf16.msra.mxu0 %v1549
          %1562 = vmatpush.bf16.msra.mxu0 %v1547
          %1563 = vmatpush.bf16.msra.mxu0 %v1545
          %1564 = vmatpush.bf16.msra.mxu0 %v1543
          %1565 = vmatpush.bf16.msra.mxu0 %v1541
          %1566 = vmatpush.bf16.msra.mxu0 %v1539
          %1567 = vmatpush.bf16.msra.mxu0 %v1537
          %1568 = vmatmul.bf16.gmra.mxu0 %v1532
          %v1569 = vpop.f32.mrf.mxu0
          %v1570 = vadd.f32 0.0, %v1569
          %v1571 = vpop.f32.mrf.mxu0
          %v1572 = vadd.f32 0.0, %v1571
          %1573 = vmatmul.bf16.gmra.mxu0 %v1533
          %v1574 = vpop.f32.mrf.mxu0
          %v1575 = vadd.f32 0.0, %v1574
          %v1576 = vpop.f32.mrf.mxu0
          %v1577 = vadd.f32 0.0, %v1576
          %1578 = vdwg.mxu0
          %v1579 = vadd.f32 %v1520, %v1570
          %v1580 = vadd.f32 %v1521, %v1572
          %v1581 = vadd.f32 %v1522, %v1575
          %v1582 = vadd.f32 %v1523, %v1577
          %1583 = vst.msk [vmem:[%s1495] sm:$0xff] %vm727, %v1579
          %1584 = vst.msk [vmem:[%s1495 + $0x8] sm:$0xff] %vm727, %v1580
          %1585 = vst.msk [vmem:[%s1495 + $0x10] sm:$0xff] %vm727, %v1581
          %1586 = vst.msk [vmem:[%s1495 + $0x18] sm:$0xff] %vm727, %v1582
          %s1587 = scalar_lea.vmem [#allocation5], 64
          %v1588 = vld [vmem:[%s1587] sm:$0xff]
          %v1589 = vld [vmem:[%s1587 + $0x8] sm:$0xff]
          %v1590 = vld [vmem:[%s1587 + $0x10] sm:$0xff]
          %v1591 = vld [vmem:[%s1587 + $0x18] sm:$0xff]
          %1593 = vset.pattern.permute.xlu0 0
          %1594 = vperm.xlu0 %1593, %v1252
          %v1595 = vpop.permute.xlu0 %1594
          %1598 = vset.pattern.permute.xlu0 0
          %1599 = vperm.xlu0 %1598, %v1254
          %v1600 = vpop.permute.xlu0 %1599
          %1603 = vset.pattern.permute.xlu0 0
          %1604 = vperm.xlu0 %1603, %v1256
          %v1605 = vpop.permute.xlu0 %1604
          %1608 = vset.pattern.permute.xlu0 0
          %1609 = vperm.xlu0 %1608, %v1258
          %v1610 = vpop.permute.xlu0 %1609
          %v1612 = vmul.f32 %v1595, %v1588
          %v1613 = vmul.f32 %v1600, %v1589
          %v1614 = vmul.f32 %v1605, %v1590
          %v1615 = vmul.f32 %v1610, %v1591
          %v1620 = vunpack.c.l.b16 %v1372
          %v1621 = vunpack.c.l.b16 %v1373
          %v1622 = vunpack.c.l.b16 %v1374
          %v1623 = vunpack.c.l.b16 %v1375
          %v1624 = vpack.c.b16 %v1621, %v1620
          %v1625 = vpack.c.b16 %v1623, %v1622
          %1628 = vrot.lane.b32.xlu0 %v1452, 112
          %v1629 = vpop.permute.xlu0 %1628
          %1630 = vrot.lane.b32.xlu0 %v1453, 112
          %v1631 = vpop.permute.xlu0 %1630
          %1632 = vrot.lane.b32.xlu0 %v1454, 112
          %v1633 = vpop.permute.xlu0 %1632
          %1634 = vrot.lane.b32.xlu0 %v1455, 112
          %v1635 = vpop.permute.xlu0 %1634
          %1636 = vrot.lane.b32.xlu0 %v1456, 112
          %v1637 = vpop.permute.xlu0 %1636
          %1638 = vrot.lane.b32.xlu0 %v1457, 112
          %v1639 = vpop.permute.xlu0 %1638
          %1640 = vrot.lane.b32.xlu0 %v1458, 112
          %v1641 = vpop.permute.xlu0 %1640
          %1642 = vrot.lane.b32.xlu0 %v1459, 112
          %v1643 = vpop.permute.xlu0 %1642
          %1652 = vmatpush.bf16.msra.mxu0 %v1643
          %1653 = vmatpush.bf16.msra.mxu0 %v1641
          %1654 = vmatpush.bf16.msra.mxu0 %v1639
          %1655 = vmatpush.bf16.msra.mxu0 %v1637
          %1656 = vmatpush.bf16.msra.mxu0 %v1635
          %1657 = vmatpush.bf16.msra.mxu0 %v1633
          %1658 = vmatpush.bf16.msra.mxu0 %v1631
          %1659 = vmatpush.bf16.msra.mxu0 %v1629
          %1660 = vmatmul.bf16.gmra.mxu0 %v1624
          %v1661 = vpop.f32.mrf.mxu0
          %v1662 = vadd.f32 0.0, %v1661
          %v1663 = vpop.f32.mrf.mxu0
          %v1664 = vadd.f32 0.0, %v1663
          %1665 = vmatmul.bf16.gmra.mxu0 %v1625
          %v1666 = vpop.f32.mrf.mxu0
          %v1667 = vadd.f32 0.0, %v1666
          %v1668 = vpop.f32.mrf.mxu0
          %v1669 = vadd.f32 0.0, %v1668
          %1670 = vdwg.mxu0
          %v1671 = vadd.f32 %v1612, %v1662
          %v1672 = vadd.f32 %v1613, %v1664
          %v1673 = vadd.f32 %v1614, %v1667
          %v1674 = vadd.f32 %v1615, %v1669
          %1675 = vst.msk [vmem:[%s1587] sm:$0xff] %vm727, %v1671
          %1676 = vst.msk [vmem:[%s1587 + $0x8] sm:$0xff] %vm727, %v1672
          %1677 = vst.msk [vmem:[%s1587 + $0x10] sm:$0xff] %vm727, %v1673
          %1678 = vst.msk [vmem:[%s1587 + $0x18] sm:$0xff] %vm727, %v1674
          %s1679 = scalar_lea.vmem [#allocation5], 96
          %v1680 = vld [vmem:[%s1679] sm:$0xff]
          %v1681 = vld [vmem:[%s1679 + $0x8] sm:$0xff]
          %v1682 = vld [vmem:[%s1679 + $0x10] sm:$0xff]
          %v1683 = vld [vmem:[%s1679 + $0x18] sm:$0xff]
          %1685 = vset.pattern.permute.xlu0 0
          %1686 = vperm.xlu0 %1685, %v1260
          %v1687 = vpop.permute.xlu0 %1686
          %1690 = vset.pattern.permute.xlu0 0
          %1691 = vperm.xlu0 %1690, %v1262
          %v1692 = vpop.permute.xlu0 %1691
          %1695 = vset.pattern.permute.xlu0 0
          %1696 = vperm.xlu0 %1695, %v1264
          %v1697 = vpop.permute.xlu0 %1696
          %1700 = vset.pattern.permute.xlu0 0
          %1701 = vperm.xlu0 %1700, %v1266
          %v1702 = vpop.permute.xlu0 %1701
          %v1704 = vmul.f32 %v1687, %v1680
          %v1705 = vmul.f32 %v1692, %v1681
          %v1706 = vmul.f32 %v1697, %v1682
          %v1707 = vmul.f32 %v1702, %v1683
          %v1712 = vunpack.c.l.b16 %v1376
          %v1713 = vunpack.c.l.b16 %v1377
          %v1714 = vunpack.c.l.b16 %v1378
          %v1715 = vunpack.c.l.b16 %v1379
          %v1716 = vpack.c.b16 %v1713, %v1712
          %v1717 = vpack.c.b16 %v1715, %v1714
          %1720 = vrot.lane.b32.xlu0 %v1452, 104
          %v1721 = vpop.permute.xlu0 %1720
          %1722 = vrot.lane.b32.xlu0 %v1453, 104
          %v1723 = vpop.permute.xlu0 %1722
          %1724 = vrot.lane.b32.xlu0 %v1454, 104
          %v1725 = vpop.permute.xlu0 %1724
          %1726 = vrot.lane.b32.xlu0 %v1455, 104
          %v1727 = vpop.permute.xlu0 %1726
          %1728 = vrot.lane.b32.xlu0 %v1456, 104
          %v1729 = vpop.permute.xlu0 %1728
          %1730 = vrot.lane.b32.xlu0 %v1457, 104
          %v1731 = vpop.permute.xlu0 %1730
          %1732 = vrot.lane.b32.xlu0 %v1458, 104
          %v1733 = vpop.permute.xlu0 %1732
          %1734 = vrot.lane.b32.xlu0 %v1459, 104
          %v1735 = vpop.permute.xlu0 %1734
          %1744 = vmatpush.bf16.msra.mxu0 %v1735
          %1745 = vmatpush.bf16.msra.mxu0 %v1733
          %1746 = vmatpush.bf16.msra.mxu0 %v1731
          %1747 = vmatpush.bf16.msra.mxu0 %v1729
          %1748 = vmatpush.bf16.msra.mxu0 %v1727
          %1749 = vmatpush.bf16.msra.mxu0 %v1725
          %1750 = vmatpush.bf16.msra.mxu0 %v1723
          %1751 = vmatpush.bf16.msra.mxu0 %v1721
          %1752 = vmatmul.bf16.gmra.mxu0 %v1716
          %v1753 = vpop.f32.mrf.mxu0
          %v1754 = vadd.f32 0.0, %v1753
          %v1755 = vpop.f32.mrf.mxu0
          %v1756 = vadd.f32 0.0, %v1755
          %1757 = vmatmul.bf16.gmra.mxu0 %v1717
          %v1758 = vpop.f32.mrf.mxu0
          %v1759 = vadd.f32 0.0, %v1758
          %v1760 = vpop.f32.mrf.mxu0
          %v1761 = vadd.f32 0.0, %v1760
          %1762 = vdwg.mxu0
          %v1763 = vadd.f32 %v1704, %v1754
          %v1764 = vadd.f32 %v1705, %v1756
          %v1765 = vadd.f32 %v1706, %v1759
          %v1766 = vadd.f32 %v1707, %v1761
          %1767 = vst.msk [vmem:[%s1679] sm:$0xff] %vm727, %v1763
          %1768 = vst.msk [vmem:[%s1679 + $0x8] sm:$0xff] %vm727, %v1764
          %1769 = vst.msk [vmem:[%s1679 + $0x10] sm:$0xff] %vm727, %v1765
          %1770 = vst.msk [vmem:[%s1679 + $0x18] sm:$0xff] %vm727, %v1766
          %1771 = vst.msk [vmem:[#allocation3] sm:$0xff] %vm1347, %v1075
          %1772 = vst.msk [vmem:[#allocation3 + $0x8] sm:$0xff] %vm1347, %v1076
          %1773 = vst.msk [vmem:[#allocation3 + $0x10] sm:$0xff] %vm1347, %v1077
          %1774 = vst.msk [vmem:[#allocation3 + $0x18] sm:$0xff] %vm1347, %v1078
          %1775 = vst.msk [vmem:[#allocation3 + $0x20] sm:$0xff] %vm1347, %v1079
          %1776 = vst.msk [vmem:[#allocation3 + $0x28] sm:$0xff] %vm1347, %v1080
          %1777 = vst.msk [vmem:[#allocation3 + $0x30] sm:$0xff] %vm1347, %v1081
          %1778 = vst.msk [vmem:[#allocation3 + $0x38] sm:$0xff] %vm1347, %v1082
          %1779 = vst.msk [vmem:[#allocation3 + $0x40] sm:$0xff] %vm1347, %v1083
          %1780 = vst.msk [vmem:[#allocation3 + $0x48] sm:$0xff] %vm1347, %v1084
          %1781 = vst.msk [vmem:[#allocation3 + $0x50] sm:$0xff] %vm1347, %v1085
          %1782 = vst.msk [vmem:[#allocation3 + $0x58] sm:$0xff] %vm1347, %v1086
          %1783 = vst.msk [vmem:[#allocation3 + $0x60] sm:$0xff] %vm1347, %v1087
          %1784 = vst.msk [vmem:[#allocation3 + $0x68] sm:$0xff] %vm1347, %v1088
          %1785 = vst.msk [vmem:[#allocation3 + $0x70] sm:$0xff] %vm1347, %v1089
          %1786 = vst.msk [vmem:[#allocation3 + $0x78] sm:$0xff] %vm1347, %v1090
        $region60: #{tpu_custom_call.1} parent=47 // pred_fallthru
          _
        %s1787 = ssub.s32 %s497, 1
        %p1788 = scmp.eq.s32.totalorder %s28, %s1787
        // Predicated region
        $region61: #{tpu_custom_call.1} parent=47 // pred_check
          %p1789 = pneg %p1788
        $region62: #{tpu_custom_call.1} parent=47 // pred_check_branch
          %1791 = sbr.rel (%p1789) target = $region64
        $region63: #{tpu_custom_call.1} parent=47 // pred_region
          %v1792 = vld [vmem:[#allocation4] sm:$0xff]
          %v1793 = vld [vmem:[#allocation4 + $0x8] sm:$0xff]
          %v1794 = vld [vmem:[#allocation4 + $0x10] sm:$0xff]
          %v1795 = vld [vmem:[#allocation4 + $0x18] sm:$0xff]
          %v1796 = vld [vmem:[#allocation4 + $0x20] sm:$0xff]
          %v1797 = vld [vmem:[#allocation4 + $0x28] sm:$0xff]
          %v1798 = vld [vmem:[#allocation4 + $0x30] sm:$0xff]
          %v1799 = vld [vmem:[#allocation4 + $0x38] sm:$0xff]
          %v1800 = vld [vmem:[#allocation4 + $0x40] sm:$0xff]
          %v1801 = vld [vmem:[#allocation4 + $0x48] sm:$0xff]
          %v1802 = vld [vmem:[#allocation4 + $0x50] sm:$0xff]
          %v1803 = vld [vmem:[#allocation4 + $0x58] sm:$0xff]
          %v1804 = vld [vmem:[#allocation4 + $0x60] sm:$0xff]
          %v1805 = vld [vmem:[#allocation4 + $0x68] sm:$0xff]
          %v1806 = vld [vmem:[#allocation4 + $0x70] sm:$0xff]
          %v1807 = vld [vmem:[#allocation4 + $0x78] sm:$0xff]
          %v1808 = vmax.f32 %v1792, 1e-20
          %v1809 = vmax.f32 %v1793, 1e-20
          %v1810 = vmax.f32 %v1794, 1e-20
          %v1811 = vmax.f32 %v1795, 1e-20
          %v1812 = vmax.f32 %v1796, 1e-20
          %v1813 = vmax.f32 %v1797, 1e-20
          %v1814 = vmax.f32 %v1798, 1e-20
          %v1815 = vmax.f32 %v1799, 1e-20
          %v1816 = vmax.f32 %v1800, 1e-20
          %v1817 = vmax.f32 %v1801, 1e-20
          %v1818 = vmax.f32 %v1802, 1e-20
          %v1819 = vmax.f32 %v1803, 1e-20
          %v1820 = vmax.f32 %v1804, 1e-20
          %v1821 = vmax.f32 %v1805, 1e-20
          %v1822 = vmax.f32 %v1806, 1e-20
          %v1823 = vmax.f32 %v1807, 1e-20
          %v1824 = vrcp.pop %v1808
          %v1825 = vrcp.pop %v1809
          %v1826 = vrcp.pop %v1810
          %v1827 = vrcp.pop %v1811
          %v1828 = vrcp.pop %v1812
          %v1829 = vrcp.pop %v1813
          %v1830 = vrcp.pop %v1814
          %v1831 = vrcp.pop %v1815
          %v1832 = vrcp.pop %v1816
          %v1833 = vrcp.pop %v1817
          %v1834 = vrcp.pop %v1818
          %v1835 = vrcp.pop %v1819
          %v1836 = vrcp.pop %v1820
          %v1837 = vrcp.pop %v1821
          %v1838 = vrcp.pop %v1822
          %v1839 = vrcp.pop %v1823
          %v1840 = vld [vmem:[#allocation5] sm:$0xff]
          %v1841 = vld [vmem:[#allocation5 + $0x8] sm:$0xff]
          %v1842 = vld [vmem:[#allocation5 + $0x10] sm:$0xff]
          %v1843 = vld [vmem:[#allocation5 + $0x18] sm:$0xff]
          %1845 = vset.pattern.permute.xlu0 0
          %1846 = vperm.xlu0 %1845, %v1824
          %v1847 = vpop.permute.xlu0 %1846
          %1850 = vset.pattern.permute.xlu0 0
          %1851 = vperm.xlu0 %1850, %v1825
          %v1852 = vpop.permute.xlu0 %1851
          %1855 = vset.pattern.permute.xlu0 0
          %1856 = vperm.xlu0 %1855, %v1826
          %v1857 = vpop.permute.xlu0 %1856
          %1860 = vset.pattern.permute.xlu0 0
          %1861 = vperm.xlu0 %1860, %v1827
          %v1862 = vpop.permute.xlu0 %1861
          %v1864 = vmul.f32 %v1840, %v1847
          %v1865 = vmul.f32 %v1841, %v1852
          %v1866 = vmul.f32 %v1842, %v1857
          %v1867 = vmul.f32 %v1843, %v1862
          %s1868 = scalar_lea.vmem [#allocation5], 32
          %v1869 = vld [vmem:[%s1868] sm:$0xff]
          %v1870 = vld [vmem:[%s1868 + $0x8] sm:$0xff]
          %v1871 = vld [vmem:[%s1868 + $0x10] sm:$0xff]
          %v1872 = vld [vmem:[%s1868 + $0x18] sm:$0xff]
          %1874 = vset.pattern.permute.xlu0 0
          %1875 = vperm.xlu0 %1874, %v1828
          %v1876 = vpop.permute.xlu0 %1875
          %1879 = vset.pattern.permute.xlu0 0
          %1880 = vperm.xlu0 %1879, %v1829
          %v1881 = vpop.permute.xlu0 %1880
          %1884 = vset.pattern.permute.xlu0 0
          %1885 = vperm.xlu0 %1884, %v1830
          %v1886 = vpop.permute.xlu0 %1885
          %1889 = vset.pattern.permute.xlu0 0
          %1890 = vperm.xlu0 %1889, %v1831
          %v1891 = vpop.permute.xlu0 %1890
          %v1893 = vmul.f32 %v1869, %v1876
          %v1894 = vmul.f32 %v1870, %v1881
          %v1895 = vmul.f32 %v1871, %v1886
          %v1896 = vmul.f32 %v1872, %v1891
          %s1897 = scalar_lea.vmem [#allocation5], 64
          %v1898 = vld [vmem:[%s1897] sm:$0xff]
          %v1899 = vld [vmem:[%s1897 + $0x8] sm:$0xff]
          %v1900 = vld [vmem:[%s1897 + $0x10] sm:$0xff]
          %v1901 = vld [vmem:[%s1897 + $0x18] sm:$0xff]
          %1903 = vset.pattern.permute.xlu0 0
          %1904 = vperm.xlu0 %1903, %v1832
          %v1905 = vpop.permute.xlu0 %1904
          %1908 = vset.pattern.permute.xlu0 0
          %1909 = vperm.xlu0 %1908, %v1833
          %v1910 = vpop.permute.xlu0 %1909
          %1913 = vset.pattern.permute.xlu0 0
          %1914 = vperm.xlu0 %1913, %v1834
          %v1915 = vpop.permute.xlu0 %1914
          %1918 = vset.pattern.permute.xlu0 0
          %1919 = vperm.xlu0 %1918, %v1835
          %v1920 = vpop.permute.xlu0 %1919
          %v1922 = vmul.f32 %v1898, %v1905
          %v1923 = vmul.f32 %v1899, %v1910
          %v1924 = vmul.f32 %v1900, %v1915
          %v1925 = vmul.f32 %v1901, %v1920
          %s1926 = scalar_lea.vmem [#allocation5], 96
          %v1927 = vld [vmem:[%s1926] sm:$0xff]
          %v1928 = vld [vmem:[%s1926 + $0x8] sm:$0xff]
          %v1929 = vld [vmem:[%s1926 + $0x10] sm:$0xff]
          %v1930 = vld [vmem:[%s1926 + $0x18] sm:$0xff]
          %1932 = vset.pattern.permute.xlu0 0
          %1933 = vperm.xlu0 %1932, %v1836
          %v1934 = vpop.permute.xlu0 %1933
          %1937 = vset.pattern.permute.xlu0 0
          %1938 = vperm.xlu0 %1937, %v1837
          %v1939 = vpop.permute.xlu0 %1938
          %1942 = vset.pattern.permute.xlu0 0
          %1943 = vperm.xlu0 %1942, %v1838
          %v1944 = vpop.permute.xlu0 %1943
          %1947 = vset.pattern.permute.xlu0 0
          %1948 = vperm.xlu0 %1947, %v1839
          %v1949 = vpop.permute.xlu0 %1948
          %v1951 = vmul.f32 %v1927, %v1934
          %v1952 = vmul.f32 %v1928, %v1939
          %v1953 = vmul.f32 %v1929, %v1944
          %v1954 = vmul.f32 %v1930, %v1949
          %1959 = vrot.lane.b32.xlu0 %v1893, 8
          %v1960 = vpop.permute.xlu0 %1959
          %1961 = vrot.lane.b32.xlu0 %v1894, 8
          %v1962 = vpop.permute.xlu0 %1961
          %1963 = vrot.lane.b32.xlu0 %v1895, 8
          %v1964 = vpop.permute.xlu0 %1963
          %1965 = vrot.lane.b32.xlu0 %v1896, 8
          %v1966 = vpop.permute.xlu0 %1965
          %1975 = vrot.lane.b32.xlu0 %v1922, 16
          %v1976 = vpop.permute.xlu0 %1975
          %1977 = vrot.lane.b32.xlu0 %v1923, 16
          %v1978 = vpop.permute.xlu0 %1977
          %1979 = vrot.lane.b32.xlu0 %v1924, 16
          %v1980 = vpop.permute.xlu0 %1979
          %1981 = vrot.lane.b32.xlu0 %v1925, 16
          %v1982 = vpop.permute.xlu0 %1981
          %1991 = vrot.lane.b32.xlu0 %v1951, 24
          %v1992 = vpop.permute.xlu0 %1991
          %1993 = vrot.lane.b32.xlu0 %v1952, 24
          %v1994 = vpop.permute.xlu0 %1993
          %1995 = vrot.lane.b32.xlu0 %v1953, 24
          %v1996 = vpop.permute.xlu0 %1995
          %1997 = vrot.lane.b32.xlu0 %v1954, 24
          %v1998 = vpop.permute.xlu0 %1997
          %vm2003 = vcmask 64512
          %v2004 = vsel %vm2003, %v1864, %v1960
          %v2005 = vsel %vm2003, %v1865, %v1962
          %v2006 = vsel %vm2003, %v1866, %v1964
          %v2007 = vsel %vm2003, %v1867, %v1966
          %vm2008 = vcmask 130048
          %v2009 = vsel %vm2008, %v2004, %v1976
          %v2010 = vsel %vm2008, %v2005, %v1978
          %v2011 = vsel %vm2008, %v2006, %v1980
          %v2012 = vsel %vm2008, %v2007, %v1982
          %vm2013 = vcmask 195584
          %v2014 = vsel %vm2013, %v2009, %v1992
          %v2015 = vsel %vm2013, %v2010, %v1994
          %v2016 = vsel %vm2013, %v2011, %v1996
          %v2017 = vsel %vm2013, %v2012, %v1998
          %v2018 = vld [vmem:[#allocation8] sm:$0xff]
          %v2019 = vld [vmem:[#allocation8 + $0x8] sm:$0xff]
          %v2020 = vld [vmem:[#allocation8 + $0x10] sm:$0xff]
          %v2021 = vld [vmem:[#allocation8 + $0x18] sm:$0xff]
          %v2022 = vld [vmem:[%s474] sm:$0x1]
          %v2024 = vperm.slane %v2022, 0
          %v2026 = vadd.f32 %v2014, %v2024
          %v2027 = vadd.f32 %v2015, %v2024
          %v2028 = vadd.f32 %v2016, %v2024
          %v2029 = vadd.f32 %v2017, %v2024
          %v2030 = vadd.f32 %v2018, %v2026
          %v2031 = vadd.f32 %v2019, %v2027
          %v2032 = vadd.f32 %v2020, %v2028
          %v2033 = vadd.f32 %v2021, %v2029
          %vm2034 = vcmask 261120
          %2035 = vst.msk [vmem:[#allocation8] sm:$0xff] %vm2034, %v2030
          %2036 = vst.msk [vmem:[#allocation8 + $0x8] sm:$0xff] %vm2034, %v2031
          %2037 = vst.msk [vmem:[#allocation8 + $0x10] sm:$0xff] %vm2034, %v2032
          %2038 = vst.msk [vmem:[#allocation8 + $0x18] sm:$0xff] %vm2034, %v2033
        $region64: #{tpu_custom_call.1} parent=47 // pred_fallthru
          _
        %p2039 = scmp.eq.s32.totalorder %s28, 1
        %p2040 = pnand %p498, %p2039
        %p2041 = pneg %p2040
        // Predicated region
        $region65: #{tpu_custom_call.1} parent=47 // pred_check
          _
        $region66: #{tpu_custom_call.1} parent=47 // pred_check_branch
          %2043 = sbr.rel (%p2040) target = $region68
        $region67: #{tpu_custom_call.1} parent=47 // pred_region
          %v2044 = vld [vmem:[#allocation8] sm:$0xff]
          %v2045 = vld [vmem:[#allocation8 + $0x8] sm:$0xff]
          %v2046 = vld [vmem:[#allocation8 + $0x10] sm:$0xff]
          %v2047 = vld [vmem:[#allocation8 + $0x18] sm:$0xff]
          %vm2048 = vcmp.gt.f32.partialorder %v2044, 0.0
          %vm2049 = vcmp.gt.f32.partialorder %v2045, 0.0
          %vm2050 = vcmp.gt.f32.partialorder %v2046, 0.0
          %vm2051 = vcmp.gt.f32.partialorder %v2047, 0.0
          %v2052 = vmin.f32 %v2044, 0.0
          %v2053 = vmin.f32 %v2045, 0.0
          %v2054 = vmin.f32 %v2046, 0.0
          %v2055 = vmin.f32 %v2047, 0.0
          %v2056 = vmul.f32 %v2052, 1.442695
          %v2057 = vpow.pop %v2056
          %v2058 = vmul.f32 %v2053, 1.442695
          %v2059 = vpow.pop %v2058
          %v2060 = vmul.f32 %v2054, 1.442695
          %v2061 = vpow.pop %v2060
          %v2062 = vmul.f32 %v2055, 1.442695
          %v2063 = vpow.pop %v2062
          %v2064 = vsub.f32 %v2057, 1.0
          %v2065 = vsub.f32 %v2059, 1.0
          %v2066 = vsub.f32 %v2061, 1.0
          %v2067 = vsub.f32 %v2063, 1.0
          %v2068 = vsel %vm2048, %v2044, %v2064
          %v2069 = vsel %vm2049, %v2045, %v2065
          %v2070 = vsel %vm2050, %v2046, %v2066
          %v2071 = vsel %vm2051, %v2047, %v2067
          %vm2072 = vcmask 261120
          %2073 = vst.msk [vmem:[#allocation8] sm:$0xff] %vm2072, %v2068
          %2074 = vst.msk [vmem:[#allocation8 + $0x8] sm:$0xff] %vm2072, %v2069
          %2075 = vst.msk [vmem:[#allocation8 + $0x10] sm:$0xff] %vm2072, %v2070
          %2076 = vst.msk [vmem:[#allocation8 + $0x18] sm:$0xff] %vm2072, %v2071
        $region68: #{tpu_custom_call.1} parent=47 // pred_fallthru
          _
        // Predicated region
        $region69: #{tpu_custom_call.1} parent=47 // pred_check
          %p2077 = pneg %p262
        $region70: #{tpu_custom_call.1} parent=47 // pred_check_branch
          %2079 = sbr.rel (%p2077) target = $region72
        $region71: #{tpu_custom_call.1} parent=47 // pred_region
          %s2080 = smul.u32 4, %s26
          %2082 = vsyncadd [#allocation9], 0
          %s2083 = smul.addr %s2080, 8
          %s2084 = scalar_lea.hbm %s8, %s2083
          %s2085 = sshll.u32 [#allocation8], 4
          %s2086 = int_to_ptr.vmem [resolvable:$true] %s2085
          %s2087 = sshll.u32 %s2084, 4
          %s2088 = int_to_ptr.hbm [resolvable:$true] %s2087
          %2093 = dma.vmem_to_hbm [thread:$0]  %s2086, 512, %s2088, [#allocation9], 128, 128, 8
        $region72: #{tpu_custom_call.1} parent=47 // pred_fallthru
          _
        // Predicated region
        $region73: #{tpu_custom_call.1} parent=47 // pred_check
          %p2094 = pneg %p262
        $region74: #{tpu_custom_call.1} parent=47 // pred_check_branch
          %2096 = sbr.rel (%p2094) target = $region76
        $region75: #{tpu_custom_call.1} parent=47 // pred_region
          %2098 = dma.done [#allocation9], 512
        $region76: #{tpu_custom_call.1} parent=47 // pred_fallthru
          _
      $region48: #{tpu_custom_call.1} parent=5 // pred_fallthru
        _
      %p2099 = scmp.le.s32.totalorder 2, %s16
      // Predicated region
      $region77: #{tpu_custom_call.1} parent=5 // pred_check
        %p2100 = pneg %p2099
      $region78: #{tpu_custom_call.1} parent=5 // pred_check_branch
        %2102 = sbr.rel (%p2100) target = $region80
      $region79: #{tpu_custom_call.1} parent=5 // pred_region
        %s2103 = ssub.s32 %s16, 2
      $region80: #{tpu_custom_call.1} parent=5 // pred_fallthru
        _
    $region6: #{tpu_custom_call.1} parent=1 // loop_footer
      %s20 = sadd.s32 1, %s16
    $region7: #{tpu_custom_call.1} parent=1 // loop_footer_branch
      %15 = sbr.rel target = $region3
    $region8: #{tpu_custom_call.1} parent=1 // loop_exit
      _
    %2104 = vsyncpa [#allocation9], 1
    %s2105 = scalar_lea.sflag [#allocation9], 1
    %2106 = vsyncpa %s2105, 1

</llo_original>
